<compile_context>
chip_gen: v5e
topology: v5e:2x2
jax: 0.10.0
libtpu: 0.0.40
codegen_flags: <defaults>
</compile_context>

<pallas_src>
import functools

import jax
import jax.numpy as jnp
from jax.experimental import pallas as pl
from jax.experimental.pallas import tpu as pltpu


def fuzzy_neuron_kernel(x_ref, trap_ref, rhow_ref, bias_ref, sel_ref, o_ref,
                        *, n_attr, chunk):
    # x_ref:    (A, TM)        attributes on sublanes, samples on lanes
    # trap_ref: (4, NR, A)     packed [a, 1/(b-a), d, 1/(d-c)]
    # rhow_ref: (NR, A)        consequent weights
    # bias_ref: (NR, 1)        consequent bias
    # sel_ref:  (N_out_pad, NR) one-hot rule->neuron grouping (zero pad rows)
    # o_ref:    (N_out_pad, TM)
    a = trap_ref[0]                                   # (NR, A)
    inv_ba = trap_ref[1]
    d = trap_ref[2]
    inv_dc = trap_ref[3]
    rho_w = rhow_ref[...]                             # (NR, A)
    bias = bias_ref[...]                              # (NR, 1)
    sel = sel_ref[...]                                # (N_out_pad, NR)

    # Grid-invariant per-attribute parameter columns, hoisted out of the chunk
    # loop (JAX does not CSE repeated slices/broadcasts).
    cols = [(a[:, n:n + 1], inv_ba[:, n:n + 1], d[:, n:n + 1], inv_dc[:, n:n + 1])
            for n in range(n_attr)]

    tm = o_ref.shape[-1]
    # Static (unrolled) lane-chunk loop: keeps every live intermediate at
    # (NR, chunk) so the 64-vreg file is never exceeded.
    for start in range(0, tm, chunk):
        xT = x_ref[:, start:start + chunk]            # (A, CH) - one vreg
        # Consequent (TSK linear) outputs for all rules at once: MXU matmul.
        z = jnp.dot(rho_w, xT, preferred_element_type=jnp.float32) + bias

        # Rule firing strengths: unrolled VPU multiply chain over attributes.
        # NOTE: degenerate trapezoids (b==a or d==c after sorting) give inf
        # reciprocals exactly like the PyTorch reference's 0/0 division.
        w = None
        for n in range(n_attr):
            a_n, iba_n, d_n, idc_n = cols[n]
            x_n = xT[n, :][None, :]                   # (1, CH)
            left = (x_n - a_n) * iba_n                # (NR, CH)
            right = (d_n - x_n) * idc_n
            mem = jnp.clip(jnp.minimum(left, right), 0.0, 1.0)
            w = mem if w is None else w * mem

        # Rule -> neuron grouped sums on the MXU; zero rows of `sel` produce
        # the N_out padding so the store below is a full, unmasked tile.
        numer = jnp.dot(sel, z * w, preferred_element_type=jnp.float32)
        den = jnp.dot(sel, w, preferred_element_type=jnp.float32)
        o_ref[:, start:start + chunk] = numer / (den + 1e-13)


def fuzzy_neuron_layer(x, abcd, rho, tm=1024):
    """x: (M, A), abcd: (N_out, R, A, 4), rho: (N_out, R, A+1) -> (M, N_out)."""
    M, A = x.shape
    N_out, R = abcd.shape[0], abcd.shape[1]
    NR = N_out * R
    N_out_pad = pl.cdiv(N_out, 8) * 8

    # ---- parameter preprocessing (tiny, done once per call) ----
    srt = jnp.sort(abcd.astype(jnp.float32), axis=-1)
    a = srt[..., 0].reshape(NR, A)
    b = srt[..., 1].reshape(NR, A)
    c = srt[..., 2].reshape(NR, A)
    d = srt[..., 3].reshape(NR, A)
    trap = jnp.stack([a, 1.0 / (b - a), d, 1.0 / (d - c)], axis=0)  # (4, NR, A)
    rho_f = rho.astype(jnp.float32).reshape(NR, A + 1)
    rho_w = rho_f[:, :A]                              # (NR, A)
    bias = rho_f[:, A:]                               # (NR, 1)
    # One-hot rule->neuron grouping; rows >= N_out stay zero (output padding).
    sel = (jnp.arange(N_out_pad)[:, None] ==
           (jnp.arange(NR) // R)[None, :]).astype(jnp.float32)      # (Npad, NR)

    # ---- x: single transpose so samples land on the lane axis.  No pad, no
    # ones-column concat (bias handled in-kernel); the ragged final M block is
    # handled by Pallas and the garbage columns are sliced off below. ----
    x_t = x.astype(jnp.float32).T                     # (A, M)

    # ---- M tiling: 128-multiple lane tiles; cap TM so the grid has >=2 steps
    # whenever M allows it (keeps both v7x TensorCores busy). ----
    CH = 128                                          # in-kernel lane chunk
    n128 = pl.cdiv(M, CH)
    tm_cap = CH * max(1, pl.cdiv(n128, 2))
    TM = max(CH, min(int(tm), tm_cap))
    TM = (TM // CH) * CH
    grid_m = pl.cdiv(M, TM)
    M_span = grid_m * TM

    kernel = functools.partial(fuzzy_neuron_kernel, n_attr=A, chunk=CH)

    out = pl.pallas_call(
        kernel,
        out_shape=jax.ShapeDtypeStruct((N_out_pad, M_span), jnp.float32),
        grid_spec=pltpu.PrefetchScalarGridSpec(
            num_scalar_prefetch=0,
            grid=(grid_m,),
            in_specs=[
                pl.BlockSpec((A, TM), lambda m: (0, m)),           # x (streamed)
                pl.BlockSpec((4, NR, A), lambda m: (0, 0, 0)),     # trapezoid (resident)
                pl.BlockSpec((NR, A), lambda m: (0, 0)),           # rho weights (resident)
                pl.BlockSpec((NR, 1), lambda m: (0, 0)),           # rho bias (resident)
                pl.BlockSpec((N_out_pad, NR), lambda m: (0, 0)),   # rule->neuron one-hot
            ],
            out_specs=pl.BlockSpec((N_out_pad, TM), lambda m: (0, m)),
        ),
        compiler_params=pltpu.CompilerParams(
            dimension_semantics=("parallel",),
            vmem_limit_bytes=32 * 1024 * 1024),
    )(x_t, trap, rho_w, bias, sel)

    return out[:N_out, :M].T                          # (M, N_out)


def ref_forward(x, abcd, rho):
    """Pure-JAX reference mirroring the PyTorch loops (vectorized)."""
    A = x.shape[1]
    srt = jnp.sort(abcd, axis=-1)
    a, b, c, d = srt[..., 0], srt[..., 1], srt[..., 2], srt[..., 3]
    xe = x[None, None, :, :]                                   # (1,1,M,A)
    left = (xe - a[:, :, None, :]) / (b - a)[:, :, None, :]
    right = (d[:, :, None, :] - xe) / (d - c)[:, :, None, :]
    mem = jnp.clip(jnp.minimum(left, right), 0.0, 1.0)         # (N_out,R,M,A)
    w = jnp.prod(mem, axis=-1)                                 # (N_out,R,M)
    z = jnp.einsum('ma,ora->orm', x, rho[..., :A]) + rho[..., A][..., None]
    numer = jnp.sum(z * w, axis=1)                             # (N_out,M)
    den = jnp.sum(w, axis=1)
    return (numer / (den + 1e-13)).T                           # (M,N_out)


if __name__ == "__main__":
    # Small shapes consistent with the module: M samples, N_in attributes,
    # N_out ANFIS neurons each with R rules.  M is deliberately not a multiple
    # of 128 so the ragged final block is exercised; the TM heuristic gives
    # TM=256 -> a 2-step grid with a 2-chunk in-kernel lane loop.
    M, N_in, N_out, R = 300, 8, 4, 16

    key = jax.random.PRNGKey(0)
    kx, kabcd, krho = jax.random.split(key, 3)

    x = jax.random.uniform(kx, (M, N_in), dtype=jnp.float32)
    abcd = jax.random.uniform(kabcd, (N_out, R, N_in, 4), dtype=jnp.float32)
    rho = jax.random.uniform(krho, (N_out, R, N_in + 1), dtype=jnp.float32)

    out = fuzzy_neuron_layer(x, abcd, rho)
    out = jax.block_until_ready(out)

    ref = ref_forward(x, abcd, rho)
    assert out.shape == (M, N_out)
    assert jnp.allclose(out, ref, atol=1e-5, rtol=1e-5), (out, ref)

    print("KERNEL_OK")
</pallas_src>

<mosaic_0001>
module attributes {stable_mosaic.version = 11 : i64} {
  func.func @fuzzy_neuron_kernel(%arg0: i32, %arg1: memref<8x256xf32, #tpu.memory_space<vmem>>, %arg2: memref<4x64x8xf32, #tpu.memory_space<vmem>>, %arg3: memref<64x8xf32, #tpu.memory_space<vmem>>, %arg4: memref<64x1xf32, #tpu.memory_space<vmem>>, %arg5: memref<8x64xf32, #tpu.memory_space<vmem>>, %arg6: memref<8x256xf32, #tpu.memory_space<vmem>>) attributes {dimension_semantics = [#tpu.dimension_semantics<parallel>], iteration_bounds = array<i64: 2>, scalar_prefetch = 0 : i64, scratch_operands = 0 : i64, tpu.core_type = #tpu.core_type<tc>, window_params = [{transform_indices = @transform_0, window_bounds = array<i64: 8, 256>}, {pipeline_mode = #tpu.pipeline_mode<synchronous>, transform_indices = @transform_1, window_bounds = array<i64: 4, 64, 8>}, {pipeline_mode = #tpu.pipeline_mode<synchronous>, transform_indices = @transform_2, window_bounds = array<i64: 64, 8>}, {pipeline_mode = #tpu.pipeline_mode<synchronous>, transform_indices = @transform_3, window_bounds = array<i64: 64, 1>}, {pipeline_mode = #tpu.pipeline_mode<synchronous>, transform_indices = @transform_4, window_bounds = array<i64: 8, 64>}, {transform_indices = @transform_5, window_bounds = array<i64: 8, 256>}]} {
    %c0 = arith.constant 0 : index
    %c0_0 = arith.constant 0 : index
    %c0_1 = arith.constant 0 : index
    %0 = vector.load %arg2[%c0, %c0_0, %c0_1] : memref<4x64x8xf32, #tpu.memory_space<vmem>>, vector<1x64x8xf32>
    %1 = vector.shape_cast %0 : vector<1x64x8xf32> to vector<64x8xf32>
    %c1 = arith.constant 1 : index
    %c0_2 = arith.constant 0 : index
    %c0_3 = arith.constant 0 : index
    %2 = vector.load %arg2[%c1, %c0_2, %c0_3] : memref<4x64x8xf32, #tpu.memory_space<vmem>>, vector<1x64x8xf32>
    %3 = vector.shape_cast %2 : vector<1x64x8xf32> to vector<64x8xf32>
    %c2 = arith.constant 2 : index
    %c0_4 = arith.constant 0 : index
    %c0_5 = arith.constant 0 : index
    %4 = vector.load %arg2[%c2, %c0_4, %c0_5] : memref<4x64x8xf32, #tpu.memory_space<vmem>>, vector<1x64x8xf32>
    %5 = vector.shape_cast %4 : vector<1x64x8xf32> to vector<64x8xf32>
    %c3 = arith.constant 3 : index
    %c0_6 = arith.constant 0 : index
    %c0_7 = arith.constant 0 : index
    %6 = vector.load %arg2[%c3, %c0_6, %c0_7] : memref<4x64x8xf32, #tpu.memory_space<vmem>>, vector<1x64x8xf32>
    %7 = vector.shape_cast %6 : vector<1x64x8xf32> to vector<64x8xf32>
    %c0_8 = arith.constant 0 : index
    %c0_9 = arith.constant 0 : index
    %8 = vector.load %arg3[%c0_8, %c0_9] : memref<64x8xf32, #tpu.memory_space<vmem>>, vector<64x8xf32>
    %c0_10 = arith.constant 0 : index
    %c0_11 = arith.constant 0 : index
    %9 = vector.load %arg4[%c0_10, %c0_11] : memref<64x1xf32, #tpu.memory_space<vmem>>, vector<64x1xf32>
    %c0_12 = arith.constant 0 : index
    %c0_13 = arith.constant 0 : index
    %10 = vector.load %arg5[%c0_12, %c0_13] : memref<8x64xf32, #tpu.memory_space<vmem>>, vector<8x64xf32>
    %11 = vector.extract_strided_slice %1 {offsets = [0, 0], sizes = [64, 1], strides = [1, 1]} : vector<64x8xf32> to vector<64x1xf32>
    %12 = vector.extract_strided_slice %3 {offsets = [0, 0], sizes = [64, 1], strides = [1, 1]} : vector<64x8xf32> to vector<64x1xf32>
    %13 = vector.extract_strided_slice %5 {offsets = [0, 0], sizes = [64, 1], strides = [1, 1]} : vector<64x8xf32> to vector<64x1xf32>
    %14 = vector.extract_strided_slice %7 {offsets = [0, 0], sizes = [64, 1], strides = [1, 1]} : vector<64x8xf32> to vector<64x1xf32>
    %15 = vector.extract_strided_slice %1 {offsets = [0, 1], sizes = [64, 1], strides = [1, 1]} : vector<64x8xf32> to vector<64x1xf32>
    %16 = vector.extract_strided_slice %3 {offsets = [0, 1], sizes = [64, 1], strides = [1, 1]} : vector<64x8xf32> to vector<64x1xf32>
    %17 = vector.extract_strided_slice %5 {offsets = [0, 1], sizes = [64, 1], strides = [1, 1]} : vector<64x8xf32> to vector<64x1xf32>
    %18 = vector.extract_strided_slice %7 {offsets = [0, 1], sizes = [64, 1], strides = [1, 1]} : vector<64x8xf32> to vector<64x1xf32>
    %19 = vector.extract_strided_slice %1 {offsets = [0, 2], sizes = [64, 1], strides = [1, 1]} : vector<64x8xf32> to vector<64x1xf32>
    %20 = vector.extract_strided_slice %3 {offsets = [0, 2], sizes = [64, 1], strides = [1, 1]} : vector<64x8xf32> to vector<64x1xf32>
    %21 = vector.extract_strided_slice %5 {offsets = [0, 2], sizes = [64, 1], strides = [1, 1]} : vector<64x8xf32> to vector<64x1xf32>
    %22 = vector.extract_strided_slice %7 {offsets = [0, 2], sizes = [64, 1], strides = [1, 1]} : vector<64x8xf32> to vector<64x1xf32>
    %23 = vector.extract_strided_slice %1 {offsets = [0, 3], sizes = [64, 1], strides = [1, 1]} : vector<64x8xf32> to vector<64x1xf32>
    %24 = vector.extract_strided_slice %3 {offsets = [0, 3], sizes = [64, 1], strides = [1, 1]} : vector<64x8xf32> to vector<64x1xf32>
    %25 = vector.extract_strided_slice %5 {offsets = [0, 3], sizes = [64, 1], strides = [1, 1]} : vector<64x8xf32> to vector<64x1xf32>
    %26 = vector.extract_strided_slice %7 {offsets = [0, 3], sizes = [64, 1], strides = [1, 1]} : vector<64x8xf32> to vector<64x1xf32>
    %27 = vector.extract_strided_slice %1 {offsets = [0, 4], sizes = [64, 1], strides = [1, 1]} : vector<64x8xf32> to vector<64x1xf32>
    %28 = vector.extract_strided_slice %3 {offsets = [0, 4], sizes = [64, 1], strides = [1, 1]} : vector<64x8xf32> to vector<64x1xf32>
    %29 = vector.extract_strided_slice %5 {offsets = [0, 4], sizes = [64, 1], strides = [1, 1]} : vector<64x8xf32> to vector<64x1xf32>
    %30 = vector.extract_strided_slice %7 {offsets = [0, 4], sizes = [64, 1], strides = [1, 1]} : vector<64x8xf32> to vector<64x1xf32>
    %31 = vector.extract_strided_slice %1 {offsets = [0, 5], sizes = [64, 1], strides = [1, 1]} : vector<64x8xf32> to vector<64x1xf32>
    %32 = vector.extract_strided_slice %3 {offsets = [0, 5], sizes = [64, 1], strides = [1, 1]} : vector<64x8xf32> to vector<64x1xf32>
    %33 = vector.extract_strided_slice %5 {offsets = [0, 5], sizes = [64, 1], strides = [1, 1]} : vector<64x8xf32> to vector<64x1xf32>
    %34 = vector.extract_strided_slice %7 {offsets = [0, 5], sizes = [64, 1], strides = [1, 1]} : vector<64x8xf32> to vector<64x1xf32>
    %35 = vector.extract_strided_slice %1 {offsets = [0, 6], sizes = [64, 1], strides = [1, 1]} : vector<64x8xf32> to vector<64x1xf32>
    %36 = vector.extract_strided_slice %3 {offsets = [0, 6], sizes = [64, 1], strides = [1, 1]} : vector<64x8xf32> to vector<64x1xf32>
    %37 = vector.extract_strided_slice %5 {offsets = [0, 6], sizes = [64, 1], strides = [1, 1]} : vector<64x8xf32> to vector<64x1xf32>
    %38 = vector.extract_strided_slice %7 {offsets = [0, 6], sizes = [64, 1], strides = [1, 1]} : vector<64x8xf32> to vector<64x1xf32>
    %39 = vector.extract_strided_slice %1 {offsets = [0, 7], sizes = [64, 1], strides = [1, 1]} : vector<64x8xf32> to vector<64x1xf32>
    %40 = vector.extract_strided_slice %3 {offsets = [0, 7], sizes = [64, 1], strides = [1, 1]} : vector<64x8xf32> to vector<64x1xf32>
    %41 = vector.extract_strided_slice %5 {offsets = [0, 7], sizes = [64, 1], strides = [1, 1]} : vector<64x8xf32> to vector<64x1xf32>
    %42 = vector.extract_strided_slice %7 {offsets = [0, 7], sizes = [64, 1], strides = [1, 1]} : vector<64x8xf32> to vector<64x1xf32>
    %c0_14 = arith.constant 0 : index
    %c0_15 = arith.constant 0 : index
    %43 = vector.load %arg1[%c0_14, %c0_15] : memref<8x256xf32, #tpu.memory_space<vmem>>, vector<8x128xf32>
    %cst = arith.constant dense<0.000000e+00> : vector<64x128xf32>
    %44 = tpu.matmul %8, %43, %cst {dimension_numbers = #tpu.dot_dimension_numbers<[1], [0], [0], [1], [0, 0, 1, 1], [], []>} : vector<64x8xf32>, vector<8x128xf32>, vector<64x128xf32> -> vector<64x128xf32>
    %45 = vector.broadcast %9 : vector<64x1xf32> to vector<64x128xf32>
    %46 = arith.addf %44, %45 : vector<64x128xf32>
    %47 = vector.extract_strided_slice %43 {offsets = [0, 0], sizes = [1, 128], strides = [1, 1]} : vector<8x128xf32> to vector<1x128xf32>
    %48 = vector.shape_cast %47 : vector<1x128xf32> to vector<128xf32>
    %49 = vector.shape_cast %48 : vector<128xf32> to vector<1x128xf32>
    %50 = vector.broadcast %49 : vector<1x128xf32> to vector<64x128xf32>
    %51 = vector.broadcast %11 : vector<64x1xf32> to vector<64x128xf32>
    %52 = arith.subf %50, %51 : vector<64x128xf32>
    %53 = vector.broadcast %12 : vector<64x1xf32> to vector<64x128xf32>
    %54 = arith.mulf %52, %53 : vector<64x128xf32>
    %55 = vector.broadcast %13 : vector<64x1xf32> to vector<64x128xf32>
    %56 = vector.broadcast %49 : vector<1x128xf32> to vector<64x128xf32>
    %57 = arith.subf %55, %56 : vector<64x128xf32>
    %58 = vector.broadcast %14 : vector<64x1xf32> to vector<64x128xf32>
    %59 = arith.mulf %57, %58 : vector<64x128xf32>
    %60 = arith.minimumf %54, %59 : vector<64x128xf32>
    %cst_16 = arith.constant 0.000000e+00 : f32
    %cst_17 = arith.constant 1.000000e+00 : f32
    %61 = vector.broadcast %cst_16 : f32 to vector<64x128xf32>
    %62 = arith.maximumf %61, %60 : vector<64x128xf32>
    %63 = vector.broadcast %cst_17 : f32 to vector<64x128xf32>
    %64 = arith.minimumf %63, %62 : vector<64x128xf32>
    %65 = vector.extract_strided_slice %43 {offsets = [1, 0], sizes = [1, 128], strides = [1, 1]} : vector<8x128xf32> to vector<1x128xf32>
    %66 = vector.shape_cast %65 : vector<1x128xf32> to vector<128xf32>
    %67 = vector.shape_cast %66 : vector<128xf32> to vector<1x128xf32>
    %68 = vector.broadcast %67 : vector<1x128xf32> to vector<64x128xf32>
    %69 = vector.broadcast %15 : vector<64x1xf32> to vector<64x128xf32>
    %70 = arith.subf %68, %69 : vector<64x128xf32>
    %71 = vector.broadcast %16 : vector<64x1xf32> to vector<64x128xf32>
    %72 = arith.mulf %70, %71 : vector<64x128xf32>
    %73 = vector.broadcast %17 : vector<64x1xf32> to vector<64x128xf32>
    %74 = vector.broadcast %67 : vector<1x128xf32> to vector<64x128xf32>
    %75 = arith.subf %73, %74 : vector<64x128xf32>
    %76 = vector.broadcast %18 : vector<64x1xf32> to vector<64x128xf32>
    %77 = arith.mulf %75, %76 : vector<64x128xf32>
    %78 = arith.minimumf %72, %77 : vector<64x128xf32>
    %cst_18 = arith.constant 0.000000e+00 : f32
    %cst_19 = arith.constant 1.000000e+00 : f32
    %79 = vector.broadcast %cst_18 : f32 to vector<64x128xf32>
    %80 = arith.maximumf %79, %78 : vector<64x128xf32>
    %81 = vector.broadcast %cst_19 : f32 to vector<64x128xf32>
    %82 = arith.minimumf %81, %80 : vector<64x128xf32>
    %83 = arith.mulf %64, %82 : vector<64x128xf32>
    %84 = vector.extract_strided_slice %43 {offsets = [2, 0], sizes = [1, 128], strides = [1, 1]} : vector<8x128xf32> to vector<1x128xf32>
    %85 = vector.shape_cast %84 : vector<1x128xf32> to vector<128xf32>
    %86 = vector.shape_cast %85 : vector<128xf32> to vector<1x128xf32>
    %87 = vector.broadcast %86 : vector<1x128xf32> to vector<64x128xf32>
    %88 = vector.broadcast %19 : vector<64x1xf32> to vector<64x128xf32>
    %89 = arith.subf %87, %88 : vector<64x128xf32>
    %90 = vector.broadcast %20 : vector<64x1xf32> to vector<64x128xf32>
    %91 = arith.mulf %89, %90 : vector<64x128xf32>
    %92 = vector.broadcast %21 : vector<64x1xf32> to vector<64x128xf32>
    %93 = vector.broadcast %86 : vector<1x128xf32> to vector<64x128xf32>
    %94 = arith.subf %92, %93 : vector<64x128xf32>
    %95 = vector.broadcast %22 : vector<64x1xf32> to vector<64x128xf32>
    %96 = arith.mulf %94, %95 : vector<64x128xf32>
    %97 = arith.minimumf %91, %96 : vector<64x128xf32>
    %cst_20 = arith.constant 0.000000e+00 : f32
    %cst_21 = arith.constant 1.000000e+00 : f32
    %98 = vector.broadcast %cst_20 : f32 to vector<64x128xf32>
    %99 = arith.maximumf %98, %97 : vector<64x128xf32>
    %100 = vector.broadcast %cst_21 : f32 to vector<64x128xf32>
    %101 = arith.minimumf %100, %99 : vector<64x128xf32>
    %102 = arith.mulf %83, %101 : vector<64x128xf32>
    %103 = vector.extract_strided_slice %43 {offsets = [3, 0], sizes = [1, 128], strides = [1, 1]} : vector<8x128xf32> to vector<1x128xf32>
    %104 = vector.shape_cast %103 : vector<1x128xf32> to vector<128xf32>
    %105 = vector.shape_cast %104 : vector<128xf32> to vector<1x128xf32>
    %106 = vector.broadcast %105 : vector<1x128xf32> to vector<64x128xf32>
    %107 = vector.broadcast %23 : vector<64x1xf32> to vector<64x128xf32>
    %108 = arith.subf %106, %107 : vector<64x128xf32>
    %109 = vector.broadcast %24 : vector<64x1xf32> to vector<64x128xf32>
    %110 = arith.mulf %108, %109 : vector<64x128xf32>
    %111 = vector.broadcast %25 : vector<64x1xf32> to vector<64x128xf32>
    %112 = vector.broadcast %105 : vector<1x128xf32> to vector<64x128xf32>
    %113 = arith.subf %111, %112 : vector<64x128xf32>
    %114 = vector.broadcast %26 : vector<64x1xf32> to vector<64x128xf32>
    %115 = arith.mulf %113, %114 : vector<64x128xf32>
    %116 = arith.minimumf %110, %115 : vector<64x128xf32>
    %cst_22 = arith.constant 0.000000e+00 : f32
    %cst_23 = arith.constant 1.000000e+00 : f32
    %117 = vector.broadcast %cst_22 : f32 to vector<64x128xf32>
    %118 = arith.maximumf %117, %116 : vector<64x128xf32>
    %119 = vector.broadcast %cst_23 : f32 to vector<64x128xf32>
    %120 = arith.minimumf %119, %118 : vector<64x128xf32>
    %121 = arith.mulf %102, %120 : vector<64x128xf32>
    %122 = vector.extract_strided_slice %43 {offsets = [4, 0], sizes = [1, 128], strides = [1, 1]} : vector<8x128xf32> to vector<1x128xf32>
    %123 = vector.shape_cast %122 : vector<1x128xf32> to vector<128xf32>
    %124 = vector.shape_cast %123 : vector<128xf32> to vector<1x128xf32>
    %125 = vector.broadcast %124 : vector<1x128xf32> to vector<64x128xf32>
    %126 = vector.broadcast %27 : vector<64x1xf32> to vector<64x128xf32>
    %127 = arith.subf %125, %126 : vector<64x128xf32>
    %128 = vector.broadcast %28 : vector<64x1xf32> to vector<64x128xf32>
    %129 = arith.mulf %127, %128 : vector<64x128xf32>
    %130 = vector.broadcast %29 : vector<64x1xf32> to vector<64x128xf32>
    %131 = vector.broadcast %124 : vector<1x128xf32> to vector<64x128xf32>
    %132 = arith.subf %130, %131 : vector<64x128xf32>
    %133 = vector.broadcast %30 : vector<64x1xf32> to vector<64x128xf32>
    %134 = arith.mulf %132, %133 : vector<64x128xf32>
    %135 = arith.minimumf %129, %134 : vector<64x128xf32>
    %cst_24 = arith.constant 0.000000e+00 : f32
    %cst_25 = arith.constant 1.000000e+00 : f32
    %136 = vector.broadcast %cst_24 : f32 to vector<64x128xf32>
    %137 = arith.maximumf %136, %135 : vector<64x128xf32>
    %138 = vector.broadcast %cst_25 : f32 to vector<64x128xf32>
    %139 = arith.minimumf %138, %137 : vector<64x128xf32>
    %140 = arith.mulf %121, %139 : vector<64x128xf32>
    %141 = vector.extract_strided_slice %43 {offsets = [5, 0], sizes = [1, 128], strides = [1, 1]} : vector<8x128xf32> to vector<1x128xf32>
    %142 = vector.shape_cast %141 : vector<1x128xf32> to vector<128xf32>
    %143 = vector.shape_cast %142 : vector<128xf32> to vector<1x128xf32>
    %144 = vector.broadcast %143 : vector<1x128xf32> to vector<64x128xf32>
    %145 = vector.broadcast %31 : vector<64x1xf32> to vector<64x128xf32>
    %146 = arith.subf %144, %145 : vector<64x128xf32>
    %147 = vector.broadcast %32 : vector<64x1xf32> to vector<64x128xf32>
    %148 = arith.mulf %146, %147 : vector<64x128xf32>
    %149 = vector.broadcast %33 : vector<64x1xf32> to vector<64x128xf32>
    %150 = vector.broadcast %143 : vector<1x128xf32> to vector<64x128xf32>
    %151 = arith.subf %149, %150 : vector<64x128xf32>
    %152 = vector.broadcast %34 : vector<64x1xf32> to vector<64x128xf32>
    %153 = arith.mulf %151, %152 : vector<64x128xf32>
    %154 = arith.minimumf %148, %153 : vector<64x128xf32>
    %cst_26 = arith.constant 0.000000e+00 : f32
    %cst_27 = arith.constant 1.000000e+00 : f32
    %155 = vector.broadcast %cst_26 : f32 to vector<64x128xf32>
    %156 = arith.maximumf %155, %154 : vector<64x128xf32>
    %157 = vector.broadcast %cst_27 : f32 to vector<64x128xf32>
    %158 = arith.minimumf %157, %156 : vector<64x128xf32>
    %159 = arith.mulf %140, %158 : vector<64x128xf32>
    %160 = vector.extract_strided_slice %43 {offsets = [6, 0], sizes = [1, 128], strides = [1, 1]} : vector<8x128xf32> to vector<1x128xf32>
    %161 = vector.shape_cast %160 : vector<1x128xf32> to vector<128xf32>
    %162 = vector.shape_cast %161 : vector<128xf32> to vector<1x128xf32>
    %163 = vector.broadcast %162 : vector<1x128xf32> to vector<64x128xf32>
    %164 = vector.broadcast %35 : vector<64x1xf32> to vector<64x128xf32>
    %165 = arith.subf %163, %164 : vector<64x128xf32>
    %166 = vector.broadcast %36 : vector<64x1xf32> to vector<64x128xf32>
    %167 = arith.mulf %165, %166 : vector<64x128xf32>
    %168 = vector.broadcast %37 : vector<64x1xf32> to vector<64x128xf32>
    %169 = vector.broadcast %162 : vector<1x128xf32> to vector<64x128xf32>
    %170 = arith.subf %168, %169 : vector<64x128xf32>
    %171 = vector.broadcast %38 : vector<64x1xf32> to vector<64x128xf32>
    %172 = arith.mulf %170, %171 : vector<64x128xf32>
    %173 = arith.minimumf %167, %172 : vector<64x128xf32>
    %cst_28 = arith.constant 0.000000e+00 : f32
    %cst_29 = arith.constant 1.000000e+00 : f32
    %174 = vector.broadcast %cst_28 : f32 to vector<64x128xf32>
    %175 = arith.maximumf %174, %173 : vector<64x128xf32>
    %176 = vector.broadcast %cst_29 : f32 to vector<64x128xf32>
    %177 = arith.minimumf %176, %175 : vector<64x128xf32>
    %178 = arith.mulf %159, %177 : vector<64x128xf32>
    %179 = vector.extract_strided_slice %43 {offsets = [7, 0], sizes = [1, 128], strides = [1, 1]} : vector<8x128xf32> to vector<1x128xf32>
    %180 = vector.shape_cast %179 : vector<1x128xf32> to vector<128xf32>
    %181 = vector.shape_cast %180 : vector<128xf32> to vector<1x128xf32>
    %182 = vector.broadcast %181 : vector<1x128xf32> to vector<64x128xf32>
    %183 = vector.broadcast %39 : vector<64x1xf32> to vector<64x128xf32>
    %184 = arith.subf %182, %183 : vector<64x128xf32>
    %185 = vector.broadcast %40 : vector<64x1xf32> to vector<64x128xf32>
    %186 = arith.mulf %184, %185 : vector<64x128xf32>
    %187 = vector.broadcast %41 : vector<64x1xf32> to vector<64x128xf32>
    %188 = vector.broadcast %181 : vector<1x128xf32> to vector<64x128xf32>
    %189 = arith.subf %187, %188 : vector<64x128xf32>
    %190 = vector.broadcast %42 : vector<64x1xf32> to vector<64x128xf32>
    %191 = arith.mulf %189, %190 : vector<64x128xf32>
    %192 = arith.minimumf %186, %191 : vector<64x128xf32>
    %cst_30 = arith.constant 0.000000e+00 : f32
    %cst_31 = arith.constant 1.000000e+00 : f32
    %193 = vector.broadcast %cst_30 : f32 to vector<64x128xf32>
    %194 = arith.maximumf %193, %192 : vector<64x128xf32>
    %195 = vector.broadcast %cst_31 : f32 to vector<64x128xf32>
    %196 = arith.minimumf %195, %194 : vector<64x128xf32>
    %197 = arith.mulf %178, %196 : vector<64x128xf32>
    %198 = arith.mulf %46, %197 : vector<64x128xf32>
    %cst_32 = arith.constant dense<0.000000e+00> : vector<8x128xf32>
    %199 = tpu.matmul %10, %198, %cst_32 {dimension_numbers = #tpu.dot_dimension_numbers<[1], [0], [0], [1], [0, 0, 1, 1], [], []>} : vector<8x64xf32>, vector<64x128xf32>, vector<8x128xf32> -> vector<8x128xf32>
    %cst_33 = arith.constant dense<0.000000e+00> : vector<8x128xf32>
    %200 = tpu.matmul %10, %197, %cst_33 {dimension_numbers = #tpu.dot_dimension_numbers<[1], [0], [0], [1], [0, 0, 1, 1], [], []>} : vector<8x64xf32>, vector<64x128xf32>, vector<8x128xf32> -> vector<8x128xf32>
    %cst_34 = arith.constant 9.99999982E-14 : f32
    %201 = vector.broadcast %cst_34 : f32 to vector<8x128xf32>
    %202 = arith.addf %200, %201 : vector<8x128xf32>
    %203 = arith.divf %199, %202 : vector<8x128xf32>
    %c0_35 = arith.constant 0 : index
    %c0_36 = arith.constant 0 : index
    %204 = vector.load %arg6[%c0_35, %c0_36] : memref<8x256xf32, #tpu.memory_space<vmem>>, vector<8x128xf32>
    tpu.vector_store %arg6[%c0_35, %c0_36], %203 {strides = array<i32>} : memref<8x256xf32, #tpu.memory_space<vmem>>, vector<8x128xf32>,
    %c0_37 = arith.constant 0 : index
    %c128 = arith.constant 128 : index
    %205 = vector.load %arg1[%c0_37, %c128] : memref<8x256xf32, #tpu.memory_space<vmem>>, vector<8x128xf32>
    %cst_38 = arith.constant dense<0.000000e+00> : vector<64x128xf32>
    %206 = tpu.matmul %8, %205, %cst_38 {dimension_numbers = #tpu.dot_dimension_numbers<[1], [0], [0], [1], [0, 0, 1, 1], [], []>} : vector<64x8xf32>, vector<8x128xf32>, vector<64x128xf32> -> vector<64x128xf32>
    %207 = vector.broadcast %9 : vector<64x1xf32> to vector<64x128xf32>
    %208 = arith.addf %206, %207 : vector<64x128xf32>
    %209 = vector.extract_strided_slice %205 {offsets = [0, 0], sizes = [1, 128], strides = [1, 1]} : vector<8x128xf32> to vector<1x128xf32>
    %210 = vector.shape_cast %209 : vector<1x128xf32> to vector<128xf32>
    %211 = vector.shape_cast %210 : vector<128xf32> to vector<1x128xf32>
    %212 = vector.broadcast %211 : vector<1x128xf32> to vector<64x128xf32>
    %213 = vector.broadcast %11 : vector<64x1xf32> to vector<64x128xf32>
    %214 = arith.subf %212, %213 : vector<64x128xf32>
    %215 = vector.broadcast %12 : vector<64x1xf32> to vector<64x128xf32>
    %216 = arith.mulf %214, %215 : vector<64x128xf32>
    %217 = vector.broadcast %13 : vector<64x1xf32> to vector<64x128xf32>
    %218 = vector.broadcast %211 : vector<1x128xf32> to vector<64x128xf32>
    %219 = arith.subf %217, %218 : vector<64x128xf32>
    %220 = vector.broadcast %14 : vector<64x1xf32> to vector<64x128xf32>
    %221 = arith.mulf %219, %220 : vector<64x128xf32>
    %222 = arith.minimumf %216, %221 : vector<64x128xf32>
    %cst_39 = arith.constant 0.000000e+00 : f32
    %cst_40 = arith.constant 1.000000e+00 : f32
    %223 = vector.broadcast %cst_39 : f32 to vector<64x128xf32>
    %224 = arith.maximumf %223, %222 : vector<64x128xf32>
    %225 = vector.broadcast %cst_40 : f32 to vector<64x128xf32>
    %226 = arith.minimumf %225, %224 : vector<64x128xf32>
    %227 = vector.extract_strided_slice %205 {offsets = [1, 0], sizes = [1, 128], strides = [1, 1]} : vector<8x128xf32> to vector<1x128xf32>
    %228 = vector.shape_cast %227 : vector<1x128xf32> to vector<128xf32>
    %229 = vector.shape_cast %228 : vector<128xf32> to vector<1x128xf32>
    %230 = vector.broadcast %229 : vector<1x128xf32> to vector<64x128xf32>
    %231 = vector.broadcast %15 : vector<64x1xf32> to vector<64x128xf32>
    %232 = arith.subf %230, %231 : vector<64x128xf32>
    %233 = vector.broadcast %16 : vector<64x1xf32> to vector<64x128xf32>
    %234 = arith.mulf %232, %233 : vector<64x128xf32>
    %235 = vector.broadcast %17 : vector<64x1xf32> to vector<64x128xf32>
    %236 = vector.broadcast %229 : vector<1x128xf32> to vector<64x128xf32>
    %237 = arith.subf %235, %236 : vector<64x128xf32>
    %238 = vector.broadcast %18 : vector<64x1xf32> to vector<64x128xf32>
    %239 = arith.mulf %237, %238 : vector<64x128xf32>
    %240 = arith.minimumf %234, %239 : vector<64x128xf32>
    %cst_41 = arith.constant 0.000000e+00 : f32
    %cst_42 = arith.constant 1.000000e+00 : f32
    %241 = vector.broadcast %cst_41 : f32 to vector<64x128xf32>
    %242 = arith.maximumf %241, %240 : vector<64x128xf32>
    %243 = vector.broadcast %cst_42 : f32 to vector<64x128xf32>
    %244 = arith.minimumf %243, %242 : vector<64x128xf32>
    %245 = arith.mulf %226, %244 : vector<64x128xf32>
    %246 = vector.extract_strided_slice %205 {offsets = [2, 0], sizes = [1, 128], strides = [1, 1]} : vector<8x128xf32> to vector<1x128xf32>
    %247 = vector.shape_cast %246 : vector<1x128xf32> to vector<128xf32>
    %248 = vector.shape_cast %247 : vector<128xf32> to vector<1x128xf32>
    %249 = vector.broadcast %248 : vector<1x128xf32> to vector<64x128xf32>
    %250 = vector.broadcast %19 : vector<64x1xf32> to vector<64x128xf32>
    %251 = arith.subf %249, %250 : vector<64x128xf32>
    %252 = vector.broadcast %20 : vector<64x1xf32> to vector<64x128xf32>
    %253 = arith.mulf %251, %252 : vector<64x128xf32>
    %254 = vector.broadcast %21 : vector<64x1xf32> to vector<64x128xf32>
    %255 = vector.broadcast %248 : vector<1x128xf32> to vector<64x128xf32>
    %256 = arith.subf %254, %255 : vector<64x128xf32>
    %257 = vector.broadcast %22 : vector<64x1xf32> to vector<64x128xf32>
    %258 = arith.mulf %256, %257 : vector<64x128xf32>
    %259 = arith.minimumf %253, %258 : vector<64x128xf32>
    %cst_43 = arith.constant 0.000000e+00 : f32
    %cst_44 = arith.constant 1.000000e+00 : f32
    %260 = vector.broadcast %cst_43 : f32 to vector<64x128xf32>
    %261 = arith.maximumf %260, %259 : vector<64x128xf32>
    %262 = vector.broadcast %cst_44 : f32 to vector<64x128xf32>
    %263 = arith.minimumf %262, %261 : vector<64x128xf32>
    %264 = arith.mulf %245, %263 : vector<64x128xf32>
    %265 = vector.extract_strided_slice %205 {offsets = [3, 0], sizes = [1, 128], strides = [1, 1]} : vector<8x128xf32> to vector<1x128xf32>
    %266 = vector.shape_cast %265 : vector<1x128xf32> to vector<128xf32>
    %267 = vector.shape_cast %266 : vector<128xf32> to vector<1x128xf32>
    %268 = vector.broadcast %267 : vector<1x128xf32> to vector<64x128xf32>
    %269 = vector.broadcast %23 : vector<64x1xf32> to vector<64x128xf32>
    %270 = arith.subf %268, %269 : vector<64x128xf32>
    %271 = vector.broadcast %24 : vector<64x1xf32> to vector<64x128xf32>
    %272 = arith.mulf %270, %271 : vector<64x128xf32>
    %273 = vector.broadcast %25 : vector<64x1xf32> to vector<64x128xf32>
    %274 = vector.broadcast %267 : vector<1x128xf32> to vector<64x128xf32>
    %275 = arith.subf %273, %274 : vector<64x128xf32>
    %276 = vector.broadcast %26 : vector<64x1xf32> to vector<64x128xf32>
    %277 = arith.mulf %275, %276 : vector<64x128xf32>
    %278 = arith.minimumf %272, %277 : vector<64x128xf32>
    %cst_45 = arith.constant 0.000000e+00 : f32
    %cst_46 = arith.constant 1.000000e+00 : f32
    %279 = vector.broadcast %cst_45 : f32 to vector<64x128xf32>
    %280 = arith.maximumf %279, %278 : vector<64x128xf32>
    %281 = vector.broadcast %cst_46 : f32 to vector<64x128xf32>
    %282 = arith.minimumf %281, %280 : vector<64x128xf32>
    %283 = arith.mulf %264, %282 : vector<64x128xf32>
    %284 = vector.extract_strided_slice %205 {offsets = [4, 0], sizes = [1, 128], strides = [1, 1]} : vector<8x128xf32> to vector<1x128xf32>
    %285 = vector.shape_cast %284 : vector<1x128xf32> to vector<128xf32>
    %286 = vector.shape_cast %285 : vector<128xf32> to vector<1x128xf32>
    %287 = vector.broadcast %286 : vector<1x128xf32> to vector<64x128xf32>
    %288 = vector.broadcast %27 : vector<64x1xf32> to vector<64x128xf32>
    %289 = arith.subf %287, %288 : vector<64x128xf32>
    %290 = vector.broadcast %28 : vector<64x1xf32> to vector<64x128xf32>
    %291 = arith.mulf %289, %290 : vector<64x128xf32>
    %292 = vector.broadcast %29 : vector<64x1xf32> to vector<64x128xf32>
    %293 = vector.broadcast %286 : vector<1x128xf32> to vector<64x128xf32>
    %294 = arith.subf %292, %293 : vector<64x128xf32>
    %295 = vector.broadcast %30 : vector<64x1xf32> to vector<64x128xf32>
    %296 = arith.mulf %294, %295 : vector<64x128xf32>
    %297 = arith.minimumf %291, %296 : vector<64x128xf32>
    %cst_47 = arith.constant 0.000000e+00 : f32
    %cst_48 = arith.constant 1.000000e+00 : f32
    %298 = vector.broadcast %cst_47 : f32 to vector<64x128xf32>
    %299 = arith.maximumf %298, %297 : vector<64x128xf32>
    %300 = vector.broadcast %cst_48 : f32 to vector<64x128xf32>
    %301 = arith.minimumf %300, %299 : vector<64x128xf32>
    %302 = arith.mulf %283, %301 : vector<64x128xf32>
    %303 = vector.extract_strided_slice %205 {offsets = [5, 0], sizes = [1, 128], strides = [1, 1]} : vector<8x128xf32> to vector<1x128xf32>
    %304 = vector.shape_cast %303 : vector<1x128xf32> to vector<128xf32>
    %305 = vector.shape_cast %304 : vector<128xf32> to vector<1x128xf32>
    %306 = vector.broadcast %305 : vector<1x128xf32> to vector<64x128xf32>
    %307 = vector.broadcast %31 : vector<64x1xf32> to vector<64x128xf32>
    %308 = arith.subf %306, %307 : vector<64x128xf32>
    %309 = vector.broadcast %32 : vector<64x1xf32> to vector<64x128xf32>
    %310 = arith.mulf %308, %309 : vector<64x128xf32>
    %311 = vector.broadcast %33 : vector<64x1xf32> to vector<64x128xf32>
    %312 = vector.broadcast %305 : vector<1x128xf32> to vector<64x128xf32>
    %313 = arith.subf %311, %312 : vector<64x128xf32>
    %314 = vector.broadcast %34 : vector<64x1xf32> to vector<64x128xf32>
    %315 = arith.mulf %313, %314 : vector<64x128xf32>
    %316 = arith.minimumf %310, %315 : vector<64x128xf32>
    %cst_49 = arith.constant 0.000000e+00 : f32
    %cst_50 = arith.constant 1.000000e+00 : f32
    %317 = vector.broadcast %cst_49 : f32 to vector<64x128xf32>
    %318 = arith.maximumf %317, %316 : vector<64x128xf32>
    %319 = vector.broadcast %cst_50 : f32 to vector<64x128xf32>
    %320 = arith.minimumf %319, %318 : vector<64x128xf32>
    %321 = arith.mulf %302, %320 : vector<64x128xf32>
    %322 = vector.extract_strided_slice %205 {offsets = [6, 0], sizes = [1, 128], strides = [1, 1]} : vector<8x128xf32> to vector<1x128xf32>
    %323 = vector.shape_cast %322 : vector<1x128xf32> to vector<128xf32>
    %324 = vector.shape_cast %323 : vector<128xf32> to vector<1x128xf32>
    %325 = vector.broadcast %324 : vector<1x128xf32> to vector<64x128xf32>
    %326 = vector.broadcast %35 : vector<64x1xf32> to vector<64x128xf32>
    %327 = arith.subf %325, %326 : vector<64x128xf32>
    %328 = vector.broadcast %36 : vector<64x1xf32> to vector<64x128xf32>
    %329 = arith.mulf %327, %328 : vector<64x128xf32>
    %330 = vector.broadcast %37 : vector<64x1xf32> to vector<64x128xf32>
    %331 = vector.broadcast %324 : vector<1x128xf32> to vector<64x128xf32>
    %332 = arith.subf %330, %331 : vector<64x128xf32>
    %333 = vector.broadcast %38 : vector<64x1xf32> to vector<64x128xf32>
    %334 = arith.mulf %332, %333 : vector<64x128xf32>
    %335 = arith.minimumf %329, %334 : vector<64x128xf32>
    %cst_51 = arith.constant 0.000000e+00 : f32
    %cst_52 = arith.constant 1.000000e+00 : f32
    %336 = vector.broadcast %cst_51 : f32 to vector<64x128xf32>
    %337 = arith.maximumf %336, %335 : vector<64x128xf32>
    %338 = vector.broadcast %cst_52 : f32 to vector<64x128xf32>
    %339 = arith.minimumf %338, %337 : vector<64x128xf32>
    %340 = arith.mulf %321, %339 : vector<64x128xf32>
    %341 = vector.extract_strided_slice %205 {offsets = [7, 0], sizes = [1, 128], strides = [1, 1]} : vector<8x128xf32> to vector<1x128xf32>
    %342 = vector.shape_cast %341 : vector<1x128xf32> to vector<128xf32>
    %343 = vector.shape_cast %342 : vector<128xf32> to vector<1x128xf32>
    %344 = vector.broadcast %343 : vector<1x128xf32> to vector<64x128xf32>
    %345 = vector.broadcast %39 : vector<64x1xf32> to vector<64x128xf32>
    %346 = arith.subf %344, %345 : vector<64x128xf32>
    %347 = vector.broadcast %40 : vector<64x1xf32> to vector<64x128xf32>
    %348 = arith.mulf %346, %347 : vector<64x128xf32>
    %349 = vector.broadcast %41 : vector<64x1xf32> to vector<64x128xf32>
    %350 = vector.broadcast %343 : vector<1x128xf32> to vector<64x128xf32>
    %351 = arith.subf %349, %350 : vector<64x128xf32>
    %352 = vector.broadcast %42 : vector<64x1xf32> to vector<64x128xf32>
    %353 = arith.mulf %351, %352 : vector<64x128xf32>
    %354 = arith.minimumf %348, %353 : vector<64x128xf32>
    %cst_53 = arith.constant 0.000000e+00 : f32
    %cst_54 = arith.constant 1.000000e+00 : f32
    %355 = vector.broadcast %cst_53 : f32 to vector<64x128xf32>
    %356 = arith.maximumf %355, %354 : vector<64x128xf32>
    %357 = vector.broadcast %cst_54 : f32 to vector<64x128xf32>
    %358 = arith.minimumf %357, %356 : vector<64x128xf32>
    %359 = arith.mulf %340, %358 : vector<64x128xf32>
    %360 = arith.mulf %208, %359 : vector<64x128xf32>
    %cst_55 = arith.constant dense<0.000000e+00> : vector<8x128xf32>
    %361 = tpu.matmul %10, %360, %cst_55 {dimension_numbers = #tpu.dot_dimension_numbers<[1], [0], [0], [1], [0, 0, 1, 1], [], []>} : vector<8x64xf32>, vector<64x128xf32>, vector<8x128xf32> -> vector<8x128xf32>
    %cst_56 = arith.constant dense<0.000000e+00> : vector<8x128xf32>
    %362 = tpu.matmul %10, %359, %cst_56 {dimension_numbers = #tpu.dot_dimension_numbers<[1], [0], [0], [1], [0, 0, 1, 1], [], []>} : vector<8x64xf32>, vector<64x128xf32>, vector<8x128xf32> -> vector<8x128xf32>
    %cst_57 = arith.constant 9.99999982E-14 : f32
    %363 = vector.broadcast %cst_57 : f32 to vector<8x128xf32>
    %364 = arith.addf %362, %363 : vector<8x128xf32>
    %365 = arith.divf %361, %364 : vector<8x128xf32>
    %c0_58 = arith.constant 0 : index
    %c128_59 = arith.constant 128 : index
    %366 = vector.load %arg6[%c0_58, %c128_59] : memref<8x256xf32, #tpu.memory_space<vmem>>, vector<8x128xf32>
    tpu.vector_store %arg6[%c0_58, %c128_59], %365 {strides = array<i32>} : memref<8x256xf32, #tpu.memory_space<vmem>>, vector<8x128xf32>,
    return
  }
  func.func @transform_0(%arg0: i32) -> (i32, i32) {
    %c0_i32 = arith.constant 0 : i32
    %c0_i32_0 = arith.constant 0 : i32
    return %c0_i32, %arg0 : i32, i32
  }
  func.func @transform_1(%arg0: i32) -> (i32, i32, i32) {
    %c0_i32 = arith.constant 0 : i32
    %c0_i32_0 = arith.constant 0 : i32
    %c0_i32_1 = arith.constant 0 : i32
    %c0_i32_2 = arith.constant 0 : i32
    return %c0_i32, %c0_i32_0, %c0_i32_1 : i32, i32, i32
  }
  func.func @transform_2(%arg0: i32) -> (i32, i32) {
    %c0_i32 = arith.constant 0 : i32
    %c0_i32_0 = arith.constant 0 : i32
    %c0_i32_1 = arith.constant 0 : i32
    return %c0_i32, %c0_i32_0 : i32, i32
  }
  func.func @transform_3(%arg0: i32) -> (i32, i32) {
    %c0_i32 = arith.constant 0 : i32
    %c0_i32_0 = arith.constant 0 : i32
    %c0_i32_1 = arith.constant 0 : i32
    return %c0_i32, %c0_i32_0 : i32, i32
  }
  func.func @transform_4(%arg0: i32) -> (i32, i32) {
    %c0_i32 = arith.constant 0 : i32
    %c0_i32_0 = arith.constant 0 : i32
    %c0_i32_1 = arith.constant 0 : i32
    return %c0_i32, %c0_i32_0 : i32, i32
  }
  func.func @transform_5(%arg0: i32) -> (i32, i32) {
    %c0_i32 = arith.constant 0 : i32
    %c0_i32_0 = arith.constant 0 : i32
    return %c0_i32, %arg0 : i32, i32
  }
}

</mosaic_0001>

<llo_original>
// kernel: tpu_custom_call.1
$region0: #{tpu_custom_call.1}
  #allocation0 [shape = 'u32[]', space=smem, size = 0x4, offset = 0x4, fixed_abs, tag = 'smem constant byte address 0x4 - core index']
  #allocation1 [shape = 'u32[72,128]{1,0:T(1,128)}', space=vmem, size = 0x9000, scoped, tag = 'internal scratch']
  %s0 = inlined_call_operand.vmem [shape: f32[8,300], index: 0, kind: input, shape index: {}]
  %s1 = inlined_call_operand.vmem [shape: f32[4,64,8], index: 1, kind: input, shape index: {}]
  %s2 = inlined_call_operand.vmem [shape: f32[64,8], index: 2, kind: input, shape index: {}]
  %s3 = inlined_call_operand.vmem [shape: f32[64,1], index: 3, kind: input, shape index: {}]
  %s4 = inlined_call_operand.vmem [shape: f32[8,64], index: 4, kind: input, shape index: {}]
  %s5 = inlined_call_operand.hbm [shape: f32[8,512], index: 5, kind: output, shape index: {}]
  %s6 = sld [smem:[#allocation0]]
  $region53: #{tpu_custom_call.1} parent=0
    _
  %s8 = ssub.s32 1, %s6
  %s9 = scalar_select 0, %s8, %s6
  $region1: #{tpu_custom_call.1} parent=0
    #allocation2 [shape = 'u8[16384]{0}', space=vmem, size = 0x4000, scoped, tag = 'output window, operand 0']
    #allocation3 [shape = 's32[2]{0}', space=sflag, size = 0x8, scoped, tag = 'scoped memory for tpu_custom_call.1']
    %10 = vsyncpa [#allocation3], 0
    %s11 = scalar_lea.sflag [#allocation3], 1
    %12 = vsyncpa %s11, 0
    loop: start=0, step=1, limit=4
    $region2: #{tpu_custom_call.1} parent=1 // loop_pre_header
      _
    $region3: #{tpu_custom_call.1} parent=1 // loop_header
      %s14 = sphi 0, %s18
      %p15 = scmp.ge.s32.totalorder %s14, 4
      %s24 = sphi 0, %s26
      %s27 = sphi 0, %s24
      %s28 = sphi 0, %s27
      %s44 = sphi 0, %s28
      %s48 = sphi 0, %s48
      %s50 = sphi 0, %s48
      %s51 = sphi 0, %s50
      %s65 = sphi 0, %s51
      %s69 = sphi 0, %s69
      %s71 = sphi 0, %s69
      %s72 = sphi 0, %s71
      %s86 = sphi 0, %s72
      %s90 = sphi 0, %s90
      %s92 = sphi 0, %s90
      %s93 = sphi 0, %s92
      %s107 = sphi 0, %s93
      %s111 = sphi 0, %s111
      %s113 = sphi 0, %s111
      %s114 = sphi 0, %s113
      %s128 = sphi 0, %s114
      %s134 = sphi 0, %s136
      %s137 = sphi 0, %s134
      %s138 = sphi 0, %s137
      %s154 = sphi 0, %s138
    $region4: #{tpu_custom_call.1} parent=1 // loop_header_branch
      %17 = sbr.rel (%p15) target = $region8
    $region5: #{tpu_custom_call.1} parent=1 // loop_body
      %s19 = ssub.s32 %s14, 1
      %s20 = ssub.s32 %s14, 2
      %s21 = sadd.s32 %s14, 1
      %s22 = ssub.s32 %s14, %s21
      %p23 = scmp.eq.s32.totalorder %s22, 0
      %s25 = sadd.s32 %s24, 1
      %s26 = scalar_select %p23, %s24, %s25
      %p29 = pneg %p23
      %p30 = scmp.eq.s32.totalorder %s14, 1
      %p31 = por %p29, %p30
      %p32 = scmp.ne.s32.totalorder %s24, %s27
      %p33 = scmp.eq.s32.totalorder %s14, 0
      %p34 = por %p32, %p33
      %p35 = scmp.ne.s32.totalorder %s24, %s27
      %p36 = scmp.eq.s32.totalorder %s19, 1
      %p37 = por %p35, %p36
      %p38 = scmp.ne.s32.totalorder %s27, %s28
      %p39 = scmp.eq.s32.totalorder %s19, 0
      %p40 = por %p38, %p39
      %p41 = scmp.ne.s32.totalorder %s27, %s28
      %p42 = scmp.eq.s32.totalorder %s20, 1
      %p43 = por %p41, %p42
      %p45 = scmp.ne.s32.totalorder %s28, %s44
      %p46 = scmp.eq.s32.totalorder %s20, 0
      %p47 = por %p45, %p46
      %s49 = sadd.s32 %s48, 1
      %p52 = scmp.eq.s32.totalorder %s14, 1
      %p53 = scmp.ne.s32.totalorder %s48, %s50
      %p54 = scmp.eq.s32.totalorder %s14, 0
      %p55 = por %p53, %p54
      %p56 = scmp.ne.s32.totalorder %s48, %s50
      %p57 = scmp.eq.s32.totalorder %s19, 1
      %p58 = por %p56, %p57
      %p59 = scmp.ne.s32.totalorder %s50, %s51
      %p60 = scmp.eq.s32.totalorder %s19, 0
      %p61 = por %p59, %p60
      %p62 = scmp.ne.s32.totalorder %s50, %s51
      %p63 = scmp.eq.s32.totalorder %s20, 1
      %p64 = por %p62, %p63
      %p66 = scmp.ne.s32.totalorder %s51, %s65
      %p67 = scmp.eq.s32.totalorder %s20, 0
      %p68 = por %p66, %p67
      %s70 = sadd.s32 %s69, 1
      %p73 = scmp.eq.s32.totalorder %s14, 1
      %p74 = scmp.ne.s32.totalorder %s69, %s71
      %p75 = scmp.eq.s32.totalorder %s14, 0
      %p76 = por %p74, %p75
      %p77 = scmp.ne.s32.totalorder %s69, %s71
      %p78 = scmp.eq.s32.totalorder %s19, 1
      %p79 = por %p77, %p78
      %p80 = scmp.ne.s32.totalorder %s71, %s72
      %p81 = scmp.eq.s32.totalorder %s19, 0
      %p82 = por %p80, %p81
      %p83 = scmp.ne.s32.totalorder %s71, %s72
      %p84 = scmp.eq.s32.totalorder %s20, 1
      %p85 = por %p83, %p84
      %p87 = scmp.ne.s32.totalorder %s72, %s86
      %p88 = scmp.eq.s32.totalorder %s20, 0
      %p89 = por %p87, %p88
      %s91 = sadd.s32 %s90, 1
      %p94 = scmp.eq.s32.totalorder %s14, 1
      %p95 = scmp.ne.s32.totalorder %s90, %s92
      %p96 = scmp.eq.s32.totalorder %s14, 0
      %p97 = por %p95, %p96
      %p98 = scmp.ne.s32.totalorder %s90, %s92
      %p99 = scmp.eq.s32.totalorder %s19, 1
      %p100 = por %p98, %p99
      %p101 = scmp.ne.s32.totalorder %s92, %s93
      %p102 = scmp.eq.s32.totalorder %s19, 0
      %p103 = por %p101, %p102
      %p104 = scmp.ne.s32.totalorder %s92, %s93
      %p105 = scmp.eq.s32.totalorder %s20, 1
      %p106 = por %p104, %p105
      %p108 = scmp.ne.s32.totalorder %s93, %s107
      %p109 = scmp.eq.s32.totalorder %s20, 0
      %p110 = por %p108, %p109
      %s112 = sadd.s32 %s111, 1
      %p115 = scmp.eq.s32.totalorder %s14, 1
      %p116 = scmp.ne.s32.totalorder %s111, %s113
      %p117 = scmp.eq.s32.totalorder %s14, 0
      %p118 = por %p116, %p117
      %p119 = scmp.ne.s32.totalorder %s111, %s113
      %p120 = scmp.eq.s32.totalorder %s19, 1
      %p121 = por %p119, %p120
      %p122 = scmp.ne.s32.totalorder %s113, %s114
      %p123 = scmp.eq.s32.totalorder %s19, 0
      %p124 = por %p122, %p123
      %p125 = scmp.ne.s32.totalorder %s113, %s114
      %p126 = scmp.eq.s32.totalorder %s20, 1
      %p127 = por %p125, %p126
      %p129 = scmp.ne.s32.totalorder %s114, %s128
      %p130 = scmp.eq.s32.totalorder %s20, 0
      %p131 = por %p129, %p130
      %s132 = ssub.s32 %s14, %s21
      %p133 = scmp.eq.s32.totalorder %s132, 0
      %s135 = sadd.s32 %s134, 1
      %s136 = scalar_select %p133, %s134, %s135
      %p139 = pneg %p133
      %p140 = scmp.eq.s32.totalorder %s14, 1
      %p141 = por %p139, %p140
      %p142 = scmp.ne.s32.totalorder %s134, %s137
      %p143 = scmp.eq.s32.totalorder %s14, 0
      %p144 = por %p142, %p143
      %p145 = scmp.ne.s32.totalorder %s134, %s137
      %p146 = scmp.eq.s32.totalorder %s19, 1
      %p147 = por %p145, %p146
      %p148 = scmp.ne.s32.totalorder %s137, %s138
      %p149 = scmp.eq.s32.totalorder %s19, 0
      %p150 = por %p148, %p149
      %p151 = scmp.ne.s32.totalorder %s137, %s138
      %p152 = scmp.eq.s32.totalorder %s20, 1
      %p153 = por %p151, %p152
      %p155 = scmp.ne.s32.totalorder %s138, %s154
      %p156 = scmp.eq.s32.totalorder %s20, 0
      %p157 = por %p155, %p156
      %p158 = scmp.le.s32.totalorder 1, %s14
      %p159 = scmp.lt.s32.totalorder %s14, 3
      %p160 = pnand %p158, %p159
      %p161 = pneg %p160
      // Predicated region
      $region9: #{tpu_custom_call.1} parent=5 // pred_check
        _
      $region10: #{tpu_custom_call.1} parent=5 // pred_check_branch
        %163 = sbr.rel (%p160) target = $region12
      $region11: #{tpu_custom_call.1} parent=5 // pred_region
        %s164 = ssub.s32 %s14, 1
        // Predicated region
        $region13: #{tpu_custom_call.1} parent=11 // pred_check
          %p165 = pneg %p61
        $region14: #{tpu_custom_call.1} parent=11 // pred_check_branch
          %167 = sbr.rel (%p165) target = $region16
        $region15: #{tpu_custom_call.1} parent=11 // pred_region
          _
        $region16: #{tpu_custom_call.1} parent=11 // pred_fallthru
          _
        // Predicated region
        $region17: #{tpu_custom_call.1} parent=11 // pred_check
          %p168 = pneg %p82
        $region18: #{tpu_custom_call.1} parent=11 // pred_check_branch
          %170 = sbr.rel (%p168) target = $region20
        $region19: #{tpu_custom_call.1} parent=11 // pred_region
          _
        $region20: #{tpu_custom_call.1} parent=11 // pred_fallthru
          _
        // Predicated region
        $region21: #{tpu_custom_call.1} parent=11 // pred_check
          %p171 = pneg %p103
        $region22: #{tpu_custom_call.1} parent=11 // pred_check_branch
          %173 = sbr.rel (%p171) target = $region24
        $region23: #{tpu_custom_call.1} parent=11 // pred_region
          _
        $region24: #{tpu_custom_call.1} parent=11 // pred_fallthru
          _
        // Predicated region
        $region25: #{tpu_custom_call.1} parent=11 // pred_check
          %p174 = pneg %p124
        $region26: #{tpu_custom_call.1} parent=11 // pred_check_branch
          %176 = sbr.rel (%p174) target = $region28
        $region27: #{tpu_custom_call.1} parent=11 // pred_region
          _
        $region28: #{tpu_custom_call.1} parent=11 // pred_fallthru
          _
      $region12: #{tpu_custom_call.1} parent=5 // pred_fallthru
        _
      %p177 = scmp.lt.s32.totalorder %s14, 2
      // Predicated region
      $region29: #{tpu_custom_call.1} parent=5 // pred_check
        %p178 = pneg %p177
      $region30: #{tpu_custom_call.1} parent=5 // pred_check_branch
        %180 = sbr.rel (%p178) target = $region32
      $region31: #{tpu_custom_call.1} parent=5 // pred_region
        // Predicated region
        $region33: #{tpu_custom_call.1} parent=31 // pred_check
          %p181 = pneg %p34
        $region34: #{tpu_custom_call.1} parent=31 // pred_check_branch
          %183 = sbr.rel (%p181) target = $region36
        $region35: #{tpu_custom_call.1} parent=31 // pred_region
          %s184 = smul.u32 2, %s14
          %s185 = ssub.s32 3, %s184
          %p186 = scmp.lt.s32.totalorder %s185, 2
          %s187 = scalar_select %p186, %s185, 2
          %s188 = smul.u32 8, %s187
          %p189 = scmp.lt.s32.totalorder %s184, 2
          %s190 = scalar_select %p189, %s184, 2
          %s191 = smul.addr %s190, 8
          %s192 = scalar_lea.vmem %s0, %s191
          %s193 = smul.u32 2, %s14
          %s194 = ssub.s32 3, %s193
          %p195 = scmp.lt.s32.totalorder %s194, 2
          %s196 = scalar_select %p195, %s194, 2
          %s197 = smul.u32 8, %s196
        $region36: #{tpu_custom_call.1} parent=31 // pred_fallthru
          _
      $region32: #{tpu_custom_call.1} parent=5 // pred_fallthru
        _
      %p198 = scmp.le.s32.totalorder 1, %s14
      %p199 = scmp.lt.s32.totalorder %s14, 3
      %p200 = pnand %p198, %p199
      %p201 = pneg %p200
      // Predicated region
      $region37: #{tpu_custom_call.1} parent=5 // pred_check
        _
      $region38: #{tpu_custom_call.1} parent=5 // pred_check_branch
        %203 = sbr.rel (%p200) target = $region40
      $region39: #{tpu_custom_call.1} parent=5 // pred_region
        %s204 = ssub.s32 %s14, 1
        %s205 = smul.u32 2, %s19
        %s206 = ssub.s32 3, %s205
        %p207 = scmp.lt.s32.totalorder %s206, 2
        %s208 = scalar_select %p207, %s206, 2
        %s209 = smul.u32 8, %s208
        %p210 = scmp.lt.s32.totalorder %s205, 2
        %s211 = scalar_select %p210, %s205, 2
        %s212 = smul.addr %s211, 8
        %s213 = scalar_lea.vmem %s0, %s212
        %p214 = pneg %p40
        %p215 = pneg %p37
        %p216 = pneg %p61
        %p217 = pneg %p58
        %p218 = pneg %p82
        %p219 = pneg %p79
        %p220 = pneg %p103
        %p221 = pneg %p100
        %p222 = pneg %p124
        %p223 = pneg %p121
        %p224 = pneg %p150
        %p225 = pneg %p147
        %s226 = sand.u32 %s137, 1
        %s227 = scalar_lea.sflag [#allocation3], %s226
        %s228 = sand.u32 %s137, 1
        %s229 = smul.addr %s228, 16
        %s230 = scalar_lea.vmem [#allocation2], %s229
        %s231 = smul.u32 2, %s19
        %s232 = ssub.s32 3, %s231
        %p233 = scmp.lt.s32.totalorder %s232, 2
        %s234 = scalar_select %p233, %s232, 2
        %s235 = smul.u32 8, %s234
        %p236 = scmp.lt.s32.totalorder %s231, 2
        %s237 = scalar_select %p236, %s231, 2
        %s238 = smul.addr %s237, 8
        %s239 = scalar_lea.vmem %s0, %s238
        %s240 = smul.u32 2, %s19
        %s241 = ssub.s32 3, %s240
        %p242 = scmp.lt.s32.totalorder %s241, 2
        %s243 = scalar_select %p242, %s241, 2
        %s244 = smul.u32 8, %s243
        %s245 = smul.u32 2, %s19
        %v246 = vld [vmem:[%s1] sm:$0xff]
        %v247 = vld [vmem:[%s1 + $0x8] sm:$0xff]
        %v248 = vld [vmem:[%s1 + $0x10] sm:$0xff]
        %v249 = vld [vmem:[%s1 + $0x18] sm:$0xff]
        %v250 = vld [vmem:[%s1 + $0x20] sm:$0xff]
        %v251 = vld [vmem:[%s1 + $0x28] sm:$0xff]
        %v252 = vld [vmem:[%s1 + $0x30] sm:$0xff]
        %v253 = vld [vmem:[%s1 + $0x38] sm:$0xff]
        %s254 = scalar_lea.vmem %s1, 64
        %v255 = vld [vmem:[%s254] sm:$0xff]
        %v256 = vld [vmem:[%s254 + $0x8] sm:$0xff]
        %v257 = vld [vmem:[%s254 + $0x10] sm:$0xff]
        %v258 = vld [vmem:[%s254 + $0x18] sm:$0xff]
        %v259 = vld [vmem:[%s254 + $0x20] sm:$0xff]
        %v260 = vld [vmem:[%s254 + $0x28] sm:$0xff]
        %v261 = vld [vmem:[%s254 + $0x30] sm:$0xff]
        %v262 = vld [vmem:[%s254 + $0x38] sm:$0xff]
        %s263 = scalar_lea.vmem %s1, 128
        %v264 = vld [vmem:[%s263] sm:$0xff]
        %v265 = vld [vmem:[%s263 + $0x8] sm:$0xff]
        %v266 = vld [vmem:[%s263 + $0x10] sm:$0xff]
        %v267 = vld [vmem:[%s263 + $0x18] sm:$0xff]
        %v268 = vld [vmem:[%s263 + $0x20] sm:$0xff]
        %v269 = vld [vmem:[%s263 + $0x28] sm:$0xff]
        %v270 = vld [vmem:[%s263 + $0x30] sm:$0xff]
        %v271 = vld [vmem:[%s263 + $0x38] sm:$0xff]
        %s272 = scalar_lea.vmem %s1, 192
        %v273 = vld [vmem:[%s272] sm:$0xff]
        %v274 = vld [vmem:[%s272 + $0x8] sm:$0xff]
        %v275 = vld [vmem:[%s272 + $0x10] sm:$0xff]
        %v276 = vld [vmem:[%s272 + $0x18] sm:$0xff]
        %v277 = vld [vmem:[%s272 + $0x20] sm:$0xff]
        %v278 = vld [vmem:[%s272 + $0x28] sm:$0xff]
        %v279 = vld [vmem:[%s272 + $0x30] sm:$0xff]
        %v280 = vld [vmem:[%s272 + $0x38] sm:$0xff]
        %v281 = vld [vmem:[%s2] sm:$0xff]
        %v282 = vld [vmem:[%s2 + $0x8] sm:$0xff]
        %v283 = vld [vmem:[%s2 + $0x10] sm:$0xff]
        %v284 = vld [vmem:[%s2 + $0x18] sm:$0xff]
        %v285 = vld [vmem:[%s2 + $0x20] sm:$0xff]
        %v286 = vld [vmem:[%s2 + $0x28] sm:$0xff]
        %v287 = vld [vmem:[%s2 + $0x30] sm:$0xff]
        %v288 = vld [vmem:[%s2 + $0x38] sm:$0xff]
        %v289 = vld [vmem:[%s3] sm:$0xff]
        %v290 = vld [vmem:[%s3 + $0x8] sm:$0xff]
        %v291 = vld [vmem:[%s3 + $0x10] sm:$0xff]
        %v292 = vld [vmem:[%s3 + $0x18] sm:$0xff]
        %v293 = vld [vmem:[%s3 + $0x20] sm:$0xff]
        %v294 = vld [vmem:[%s3 + $0x28] sm:$0xff]
        %v295 = vld [vmem:[%s3 + $0x30] sm:$0xff]
        %v296 = vld [vmem:[%s3 + $0x38] sm:$0xff]
        %v297 = vld [vmem:[%s4] sm:$0xff]
        %v298 = vld [vmem:[%s239] sm:$0xff]
        %300 = vset.pattern.permute.xlu0 0
        %301 = vperm.xlu0 %300, %v289
        %v302 = vpop.permute.xlu0 %301
        %305 = vset.pattern.permute.xlu0 0
        %306 = vperm.xlu0 %305, %v290
        %v307 = vpop.permute.xlu0 %306
        %310 = vset.pattern.permute.xlu0 0
        %311 = vperm.xlu0 %310, %v291
        %v312 = vpop.permute.xlu0 %311
        %315 = vset.pattern.permute.xlu0 0
        %316 = vperm.xlu0 %315, %v292
        %v317 = vpop.permute.xlu0 %316
        %320 = vset.pattern.permute.xlu0 0
        %321 = vperm.xlu0 %320, %v293
        %v322 = vpop.permute.xlu0 %321
        %325 = vset.pattern.permute.xlu0 0
        %326 = vperm.xlu0 %325, %v294
        %v327 = vpop.permute.xlu0 %326
        %330 = vset.pattern.permute.xlu0 0
        %331 = vperm.xlu0 %330, %v295
        %v332 = vpop.permute.xlu0 %331
        %335 = vset.pattern.permute.xlu0 0
        %336 = vperm.xlu0 %335, %v296
        %v337 = vpop.permute.xlu0 %336
        %vm339 = vcmask 64512
        %v341 = vsel %vm339, %v281, 0
        %v344 = vsel %vm339, %v282, 0
        %v347 = vsel %vm339, %v283, 0
        %v350 = vsel %vm339, %v284, 0
        %v353 = vsel %vm339, %v285, 0
        %v356 = vsel %vm339, %v286, 0
        %v359 = vsel %vm339, %v287, 0
        %v362 = vsel %vm339, %v288, 0
        %364 = vmatpush.msra.mxu0 0.0
        %365 = vmatpush.msra.mxu0 0.0
        %366 = vmatpush.msra.mxu0 0.0
        %367 = vmatpush.msra.mxu0 0.0
        %368 = vmatpush.msra.mxu0 0.0
        %369 = vmatpush.msra.mxu0 0.0
        %370 = vmatpush.msra.mxu0 0.0
        %371 = vmatpush.msra.mxu0 0.0
        %372 = vmatpush.msra.mxu0 0.0
        %373 = vmatpush.msra.mxu0 0.0
        %374 = vmatpush.msra.mxu0 0.0
        %375 = vmatpush.msra.mxu0 0.0
        %376 = vmatpush.msra.mxu0 0.0
        %377 = vmatpush.msra.mxu0 0.0
        %378 = vmatpush.msra.mxu0 0.0
        %379 = vmatpush.msra.mxu0 %v298
        %380 = vmatmul.f32.gmra.mxu0 %v341
        %v381 = vpop.f32.mrf.mxu0
        %v382 = vadd.f32 %v302, %v381
        %383 = vmatmul.f32.gmra.mxu0 %v344
        %v384 = vpop.f32.mrf.mxu0
        %v385 = vadd.f32 %v307, %v384
        %386 = vmatmul.f32.gmra.mxu0 %v347
        %v387 = vpop.f32.mrf.mxu0
        %v388 = vadd.f32 %v312, %v387
        %389 = vmatmul.f32.gmra.mxu0 %v350
        %v390 = vpop.f32.mrf.mxu0
        %v391 = vadd.f32 %v317, %v390
        %392 = vmatmul.f32.gmra.mxu0 %v353
        %v393 = vpop.f32.mrf.mxu0
        %v394 = vadd.f32 %v322, %v393
        %395 = vmatmul.f32.gmra.mxu0 %v356
        %v396 = vpop.f32.mrf.mxu0
        %v397 = vadd.f32 %v327, %v396
        %398 = vmatmul.f32.gmra.mxu0 %v359
        %v399 = vpop.f32.mrf.mxu0
        %v400 = vadd.f32 %v332, %v399
        %401 = vmatmul.f32.gmra.mxu0 %v362
        %v402 = vpop.f32.mrf.mxu0
        %v403 = vadd.f32 %v337, %v402
        %404 = vdwg.mxu0
        %v405 = vperm.slane %v298, 0
        %407 = vset.pattern.permute.xlu0 0
        %408 = vperm.xlu0 %407, %v246
        %v409 = vpop.permute.xlu0 %408
        %412 = vset.pattern.permute.xlu0 0
        %413 = vperm.xlu0 %412, %v247
        %v414 = vpop.permute.xlu0 %413
        %417 = vset.pattern.permute.xlu0 0
        %418 = vperm.xlu0 %417, %v248
        %v419 = vpop.permute.xlu0 %418
        %422 = vset.pattern.permute.xlu0 0
        %423 = vperm.xlu0 %422, %v249
        %v424 = vpop.permute.xlu0 %423
        %427 = vset.pattern.permute.xlu0 0
        %428 = vperm.xlu0 %427, %v250
        %v429 = vpop.permute.xlu0 %428
        %432 = vset.pattern.permute.xlu0 0
        %433 = vperm.xlu0 %432, %v251
        %v434 = vpop.permute.xlu0 %433
        %437 = vset.pattern.permute.xlu0 0
        %438 = vperm.xlu0 %437, %v252
        %v439 = vpop.permute.xlu0 %438
        %442 = vset.pattern.permute.xlu0 0
        %443 = vperm.xlu0 %442, %v253
        %v444 = vpop.permute.xlu0 %443
        %v446 = vsub.f32 %v405, %v409
        %v447 = vsub.f32 %v405, %v414
        %v448 = vsub.f32 %v405, %v419
        %v449 = vsub.f32 %v405, %v424
        %v450 = vsub.f32 %v405, %v429
        %v451 = vsub.f32 %v405, %v434
        %v452 = vsub.f32 %v405, %v439
        %v453 = vsub.f32 %v405, %v444
        %455 = vset.pattern.permute.xlu0 0
        %456 = vperm.xlu0 %455, %v255
        %v457 = vpop.permute.xlu0 %456
        %460 = vset.pattern.permute.xlu0 0
        %461 = vperm.xlu0 %460, %v256
        %v462 = vpop.permute.xlu0 %461
        %465 = vset.pattern.permute.xlu0 0
        %466 = vperm.xlu0 %465, %v257
        %v467 = vpop.permute.xlu0 %466
        %470 = vset.pattern.permute.xlu0 0
        %471 = vperm.xlu0 %470, %v258
        %v472 = vpop.permute.xlu0 %471
        %475 = vset.pattern.permute.xlu0 0
        %476 = vperm.xlu0 %475, %v259
        %v477 = vpop.permute.xlu0 %476
        %480 = vset.pattern.permute.xlu0 0
        %481 = vperm.xlu0 %480, %v260
        %v482 = vpop.permute.xlu0 %481
        %485 = vset.pattern.permute.xlu0 0
        %486 = vperm.xlu0 %485, %v261
        %v487 = vpop.permute.xlu0 %486
        %490 = vset.pattern.permute.xlu0 0
        %491 = vperm.xlu0 %490, %v262
        %v492 = vpop.permute.xlu0 %491
        %v494 = vmul.f32 %v446, %v457
        %v495 = vmul.f32 %v447, %v462
        %v496 = vmul.f32 %v448, %v467
        %v497 = vmul.f32 %v449, %v472
        %v498 = vmul.f32 %v450, %v477
        %v499 = vmul.f32 %v451, %v482
        %v500 = vmul.f32 %v452, %v487
        %v501 = vmul.f32 %v453, %v492
        %503 = vset.pattern.permute.xlu0 0
        %504 = vperm.xlu0 %503, %v264
        %v505 = vpop.permute.xlu0 %504
        %508 = vset.pattern.permute.xlu0 0
        %509 = vperm.xlu0 %508, %v265
        %v510 = vpop.permute.xlu0 %509
        %513 = vset.pattern.permute.xlu0 0
        %514 = vperm.xlu0 %513, %v266
        %v515 = vpop.permute.xlu0 %514
        %518 = vset.pattern.permute.xlu0 0
        %519 = vperm.xlu0 %518, %v267
        %v520 = vpop.permute.xlu0 %519
        %523 = vset.pattern.permute.xlu0 0
        %524 = vperm.xlu0 %523, %v268
        %v525 = vpop.permute.xlu0 %524
        %528 = vset.pattern.permute.xlu0 0
        %529 = vperm.xlu0 %528, %v269
        %v530 = vpop.permute.xlu0 %529
        %533 = vset.pattern.permute.xlu0 0
        %534 = vperm.xlu0 %533, %v270
        %v535 = vpop.permute.xlu0 %534
        %538 = vset.pattern.permute.xlu0 0
        %539 = vperm.xlu0 %538, %v271
        %v540 = vpop.permute.xlu0 %539
        %v542 = vsub.f32 %v505, %v405
        %v543 = vsub.f32 %v510, %v405
        %v544 = vsub.f32 %v515, %v405
        %v545 = vsub.f32 %v520, %v405
        %v546 = vsub.f32 %v525, %v405
        %v547 = vsub.f32 %v530, %v405
        %v548 = vsub.f32 %v535, %v405
        %v549 = vsub.f32 %v540, %v405
        %551 = vset.pattern.permute.xlu0 0
        %552 = vperm.xlu0 %551, %v273
        %v553 = vpop.permute.xlu0 %552
        %556 = vset.pattern.permute.xlu0 0
        %557 = vperm.xlu0 %556, %v274
        %v558 = vpop.permute.xlu0 %557
        %561 = vset.pattern.permute.xlu0 0
        %562 = vperm.xlu0 %561, %v275
        %v563 = vpop.permute.xlu0 %562
        %566 = vset.pattern.permute.xlu0 0
        %567 = vperm.xlu0 %566, %v276
        %v568 = vpop.permute.xlu0 %567
        %571 = vset.pattern.permute.xlu0 0
        %572 = vperm.xlu0 %571, %v277
        %v573 = vpop.permute.xlu0 %572
        %576 = vset.pattern.permute.xlu0 0
        %577 = vperm.xlu0 %576, %v278
        %v578 = vpop.permute.xlu0 %577
        %581 = vset.pattern.permute.xlu0 0
        %582 = vperm.xlu0 %581, %v279
        %v583 = vpop.permute.xlu0 %582
        %586 = vset.pattern.permute.xlu0 0
        %587 = vperm.xlu0 %586, %v280
        %v588 = vpop.permute.xlu0 %587
        %v590 = vmul.f32 %v542, %v553
        %v591 = vmul.f32 %v543, %v558
        %v592 = vmul.f32 %v544, %v563
        %v593 = vmul.f32 %v545, %v568
        %v594 = vmul.f32 %v546, %v573
        %v595 = vmul.f32 %v547, %v578
        %v596 = vmul.f32 %v548, %v583
        %v597 = vmul.f32 %v549, %v588
        %v598 = vmin.f32 %v494, %v590
        %v599 = vmin.f32 %v495, %v591
        %v600 = vmin.f32 %v496, %v592
        %v601 = vmin.f32 %v497, %v593
        %v602 = vmin.f32 %v498, %v594
        %v603 = vmin.f32 %v499, %v595
        %v604 = vmin.f32 %v500, %v596
        %v605 = vmin.f32 %v501, %v597
        %v606 = vmax.f32 %v598, 0.0
        %v607 = vmax.f32 %v599, 0.0
        %v608 = vmax.f32 %v600, 0.0
        %v609 = vmax.f32 %v601, 0.0
        %v610 = vmax.f32 %v602, 0.0
        %v611 = vmax.f32 %v603, 0.0
        %v612 = vmax.f32 %v604, 0.0
        %v613 = vmax.f32 %v605, 0.0
        %v614 = vmin.f32 %v606, 1.0
        %v615 = vmin.f32 %v607, 1.0
        %v616 = vmin.f32 %v608, 1.0
        %v617 = vmin.f32 %v609, 1.0
        %v618 = vmin.f32 %v610, 1.0
        %v619 = vmin.f32 %v611, 1.0
        %v620 = vmin.f32 %v612, 1.0
        %v621 = vmin.f32 %v613, 1.0
        %v622 = vperm.slane %v298, 1
        %623 = vset.pattern.permute.xlu0 1
        %624 = vperm.xlu0 %623, %v246
        %v625 = vpop.permute.xlu0 %624
        %627 = vset.pattern.permute.xlu0 1
        %628 = vperm.xlu0 %627, %v247
        %v629 = vpop.permute.xlu0 %628
        %631 = vset.pattern.permute.xlu0 1
        %632 = vperm.xlu0 %631, %v248
        %v633 = vpop.permute.xlu0 %632
        %635 = vset.pattern.permute.xlu0 1
        %636 = vperm.xlu0 %635, %v249
        %v637 = vpop.permute.xlu0 %636
        %639 = vset.pattern.permute.xlu0 1
        %640 = vperm.xlu0 %639, %v250
        %v641 = vpop.permute.xlu0 %640
        %643 = vset.pattern.permute.xlu0 1
        %644 = vperm.xlu0 %643, %v251
        %v645 = vpop.permute.xlu0 %644
        %647 = vset.pattern.permute.xlu0 1
        %648 = vperm.xlu0 %647, %v252
        %v649 = vpop.permute.xlu0 %648
        %651 = vset.pattern.permute.xlu0 1
        %652 = vperm.xlu0 %651, %v253
        %v653 = vpop.permute.xlu0 %652
        %v655 = vsub.f32 %v622, %v625
        %v656 = vsub.f32 %v622, %v629
        %v657 = vsub.f32 %v622, %v633
        %v658 = vsub.f32 %v622, %v637
        %v659 = vsub.f32 %v622, %v641
        %v660 = vsub.f32 %v622, %v645
        %v661 = vsub.f32 %v622, %v649
        %v662 = vsub.f32 %v622, %v653
        %663 = vset.pattern.permute.xlu0 1
        %664 = vperm.xlu0 %663, %v255
        %v665 = vpop.permute.xlu0 %664
        %667 = vset.pattern.permute.xlu0 1
        %668 = vperm.xlu0 %667, %v256
        %v669 = vpop.permute.xlu0 %668
        %671 = vset.pattern.permute.xlu0 1
        %672 = vperm.xlu0 %671, %v257
        %v673 = vpop.permute.xlu0 %672
        %675 = vset.pattern.permute.xlu0 1
        %676 = vperm.xlu0 %675, %v258
        %v677 = vpop.permute.xlu0 %676
        %679 = vset.pattern.permute.xlu0 1
        %680 = vperm.xlu0 %679, %v259
        %v681 = vpop.permute.xlu0 %680
        %683 = vset.pattern.permute.xlu0 1
        %684 = vperm.xlu0 %683, %v260
        %v685 = vpop.permute.xlu0 %684
        %687 = vset.pattern.permute.xlu0 1
        %688 = vperm.xlu0 %687, %v261
        %v689 = vpop.permute.xlu0 %688
        %691 = vset.pattern.permute.xlu0 1
        %692 = vperm.xlu0 %691, %v262
        %v693 = vpop.permute.xlu0 %692
        %v695 = vmul.f32 %v655, %v665
        %v696 = vmul.f32 %v656, %v669
        %v697 = vmul.f32 %v657, %v673
        %v698 = vmul.f32 %v658, %v677
        %v699 = vmul.f32 %v659, %v681
        %v700 = vmul.f32 %v660, %v685
        %v701 = vmul.f32 %v661, %v689
        %v702 = vmul.f32 %v662, %v693
        %703 = vset.pattern.permute.xlu0 1
        %704 = vperm.xlu0 %703, %v264
        %v705 = vpop.permute.xlu0 %704
        %707 = vset.pattern.permute.xlu0 1
        %708 = vperm.xlu0 %707, %v265
        %v709 = vpop.permute.xlu0 %708
        %711 = vset.pattern.permute.xlu0 1
        %712 = vperm.xlu0 %711, %v266
        %v713 = vpop.permute.xlu0 %712
        %715 = vset.pattern.permute.xlu0 1
        %716 = vperm.xlu0 %715, %v267
        %v717 = vpop.permute.xlu0 %716
        %719 = vset.pattern.permute.xlu0 1
        %720 = vperm.xlu0 %719, %v268
        %v721 = vpop.permute.xlu0 %720
        %723 = vset.pattern.permute.xlu0 1
        %724 = vperm.xlu0 %723, %v269
        %v725 = vpop.permute.xlu0 %724
        %727 = vset.pattern.permute.xlu0 1
        %728 = vperm.xlu0 %727, %v270
        %v729 = vpop.permute.xlu0 %728
        %731 = vset.pattern.permute.xlu0 1
        %732 = vperm.xlu0 %731, %v271
        %v733 = vpop.permute.xlu0 %732
        %v735 = vsub.f32 %v705, %v622
        %v736 = vsub.f32 %v709, %v622
        %v737 = vsub.f32 %v713, %v622
        %v738 = vsub.f32 %v717, %v622
        %v739 = vsub.f32 %v721, %v622
        %v740 = vsub.f32 %v725, %v622
        %v741 = vsub.f32 %v729, %v622
        %v742 = vsub.f32 %v733, %v622
        %743 = vset.pattern.permute.xlu0 1
        %744 = vperm.xlu0 %743, %v273
        %v745 = vpop.permute.xlu0 %744
        %747 = vset.pattern.permute.xlu0 1
        %748 = vperm.xlu0 %747, %v274
        %v749 = vpop.permute.xlu0 %748
        %751 = vset.pattern.permute.xlu0 1
        %752 = vperm.xlu0 %751, %v275
        %v753 = vpop.permute.xlu0 %752
        %755 = vset.pattern.permute.xlu0 1
        %756 = vperm.xlu0 %755, %v276
        %v757 = vpop.permute.xlu0 %756
        %759 = vset.pattern.permute.xlu0 1
        %760 = vperm.xlu0 %759, %v277
        %v761 = vpop.permute.xlu0 %760
        %763 = vset.pattern.permute.xlu0 1
        %764 = vperm.xlu0 %763, %v278
        %v765 = vpop.permute.xlu0 %764
        %767 = vset.pattern.permute.xlu0 1
        %768 = vperm.xlu0 %767, %v279
        %v769 = vpop.permute.xlu0 %768
        %771 = vset.pattern.permute.xlu0 1
        %772 = vperm.xlu0 %771, %v280
        %v773 = vpop.permute.xlu0 %772
        %v775 = vmul.f32 %v735, %v745
        %v776 = vmul.f32 %v736, %v749
        %v777 = vmul.f32 %v737, %v753
        %v778 = vmul.f32 %v738, %v757
        %v779 = vmul.f32 %v739, %v761
        %v780 = vmul.f32 %v740, %v765
        %v781 = vmul.f32 %v741, %v769
        %v782 = vmul.f32 %v742, %v773
        %v783 = vmin.f32 %v695, %v775
        %v784 = vmin.f32 %v696, %v776
        %v785 = vmin.f32 %v697, %v777
        %v786 = vmin.f32 %v698, %v778
        %v787 = vmin.f32 %v699, %v779
        %v788 = vmin.f32 %v700, %v780
        %v789 = vmin.f32 %v701, %v781
        %v790 = vmin.f32 %v702, %v782
        %v791 = vmax.f32 %v783, 0.0
        %v792 = vmax.f32 %v784, 0.0
        %v793 = vmax.f32 %v785, 0.0
        %v794 = vmax.f32 %v786, 0.0
        %v795 = vmax.f32 %v787, 0.0
        %v796 = vmax.f32 %v788, 0.0
        %v797 = vmax.f32 %v789, 0.0
        %v798 = vmax.f32 %v790, 0.0
        %v799 = vmin.f32 %v791, 1.0
        %v800 = vmin.f32 %v792, 1.0
        %v801 = vmin.f32 %v793, 1.0
        %v802 = vmin.f32 %v794, 1.0
        %v803 = vmin.f32 %v795, 1.0
        %v804 = vmin.f32 %v796, 1.0
        %v805 = vmin.f32 %v797, 1.0
        %v806 = vmin.f32 %v798, 1.0
        %v807 = vmul.f32 %v614, %v799
        %v808 = vmul.f32 %v615, %v800
        %v809 = vmul.f32 %v616, %v801
        %v810 = vmul.f32 %v617, %v802
        %v811 = vmul.f32 %v618, %v803
        %v812 = vmul.f32 %v619, %v804
        %v813 = vmul.f32 %v620, %v805
        %v814 = vmul.f32 %v621, %v806
        %v815 = vperm.slane %v298, 2
        %816 = vset.pattern.permute.xlu0 2
        %817 = vperm.xlu0 %816, %v246
        %v818 = vpop.permute.xlu0 %817
        %820 = vset.pattern.permute.xlu0 2
        %821 = vperm.xlu0 %820, %v247
        %v822 = vpop.permute.xlu0 %821
        %824 = vset.pattern.permute.xlu0 2
        %825 = vperm.xlu0 %824, %v248
        %v826 = vpop.permute.xlu0 %825
        %828 = vset.pattern.permute.xlu0 2
        %829 = vperm.xlu0 %828, %v249
        %v830 = vpop.permute.xlu0 %829
        %832 = vset.pattern.permute.xlu0 2
        %833 = vperm.xlu0 %832, %v250
        %v834 = vpop.permute.xlu0 %833
        %836 = vset.pattern.permute.xlu0 2
        %837 = vperm.xlu0 %836, %v251
        %v838 = vpop.permute.xlu0 %837
        %840 = vset.pattern.permute.xlu0 2
        %841 = vperm.xlu0 %840, %v252
        %v842 = vpop.permute.xlu0 %841
        %844 = vset.pattern.permute.xlu0 2
        %845 = vperm.xlu0 %844, %v253
        %v846 = vpop.permute.xlu0 %845
        %v848 = vsub.f32 %v815, %v818
        %v849 = vsub.f32 %v815, %v822
        %v850 = vsub.f32 %v815, %v826
        %v851 = vsub.f32 %v815, %v830
        %v852 = vsub.f32 %v815, %v834
        %v853 = vsub.f32 %v815, %v838
        %v854 = vsub.f32 %v815, %v842
        %v855 = vsub.f32 %v815, %v846
        %856 = vset.pattern.permute.xlu0 2
        %857 = vperm.xlu0 %856, %v255
        %v858 = vpop.permute.xlu0 %857
        %860 = vset.pattern.permute.xlu0 2
        %861 = vperm.xlu0 %860, %v256
        %v862 = vpop.permute.xlu0 %861
        %864 = vset.pattern.permute.xlu0 2
        %865 = vperm.xlu0 %864, %v257
        %v866 = vpop.permute.xlu0 %865
        %868 = vset.pattern.permute.xlu0 2
        %869 = vperm.xlu0 %868, %v258
        %v870 = vpop.permute.xlu0 %869
        %872 = vset.pattern.permute.xlu0 2
        %873 = vperm.xlu0 %872, %v259
        %v874 = vpop.permute.xlu0 %873
        %876 = vset.pattern.permute.xlu0 2
        %877 = vperm.xlu0 %876, %v260
        %v878 = vpop.permute.xlu0 %877
        %880 = vset.pattern.permute.xlu0 2
        %881 = vperm.xlu0 %880, %v261
        %v882 = vpop.permute.xlu0 %881
        %884 = vset.pattern.permute.xlu0 2
        %885 = vperm.xlu0 %884, %v262
        %v886 = vpop.permute.xlu0 %885
        %v888 = vmul.f32 %v848, %v858
        %v889 = vmul.f32 %v849, %v862
        %v890 = vmul.f32 %v850, %v866
        %v891 = vmul.f32 %v851, %v870
        %v892 = vmul.f32 %v852, %v874
        %v893 = vmul.f32 %v853, %v878
        %v894 = vmul.f32 %v854, %v882
        %v895 = vmul.f32 %v855, %v886
        %896 = vset.pattern.permute.xlu0 2
        %897 = vperm.xlu0 %896, %v264
        %v898 = vpop.permute.xlu0 %897
        %900 = vset.pattern.permute.xlu0 2
        %901 = vperm.xlu0 %900, %v265
        %v902 = vpop.permute.xlu0 %901
        %904 = vset.pattern.permute.xlu0 2
        %905 = vperm.xlu0 %904, %v266
        %v906 = vpop.permute.xlu0 %905
        %908 = vset.pattern.permute.xlu0 2
        %909 = vperm.xlu0 %908, %v267
        %v910 = vpop.permute.xlu0 %909
        %912 = vset.pattern.permute.xlu0 2
        %913 = vperm.xlu0 %912, %v268
        %v914 = vpop.permute.xlu0 %913
        %916 = vset.pattern.permute.xlu0 2
        %917 = vperm.xlu0 %916, %v269
        %v918 = vpop.permute.xlu0 %917
        %920 = vset.pattern.permute.xlu0 2
        %921 = vperm.xlu0 %920, %v270
        %v922 = vpop.permute.xlu0 %921
        %924 = vset.pattern.permute.xlu0 2
        %925 = vperm.xlu0 %924, %v271
        %v926 = vpop.permute.xlu0 %925
        %v928 = vsub.f32 %v898, %v815
        %v929 = vsub.f32 %v902, %v815
        %v930 = vsub.f32 %v906, %v815
        %v931 = vsub.f32 %v910, %v815
        %v932 = vsub.f32 %v914, %v815
        %v933 = vsub.f32 %v918, %v815
        %v934 = vsub.f32 %v922, %v815
        %v935 = vsub.f32 %v926, %v815
        %936 = vset.pattern.permute.xlu0 2
        %937 = vperm.xlu0 %936, %v273
        %v938 = vpop.permute.xlu0 %937
        %940 = vset.pattern.permute.xlu0 2
        %941 = vperm.xlu0 %940, %v274
        %v942 = vpop.permute.xlu0 %941
        %944 = vset.pattern.permute.xlu0 2
        %945 = vperm.xlu0 %944, %v275
        %v946 = vpop.permute.xlu0 %945
        %948 = vset.pattern.permute.xlu0 2
        %949 = vperm.xlu0 %948, %v276
        %v950 = vpop.permute.xlu0 %949
        %952 = vset.pattern.permute.xlu0 2
        %953 = vperm.xlu0 %952, %v277
        %v954 = vpop.permute.xlu0 %953
        %956 = vset.pattern.permute.xlu0 2
        %957 = vperm.xlu0 %956, %v278
        %v958 = vpop.permute.xlu0 %957
        %960 = vset.pattern.permute.xlu0 2
        %961 = vperm.xlu0 %960, %v279
        %v962 = vpop.permute.xlu0 %961
        %964 = vset.pattern.permute.xlu0 2
        %965 = vperm.xlu0 %964, %v280
        %v966 = vpop.permute.xlu0 %965
        %v968 = vmul.f32 %v928, %v938
        %v969 = vmul.f32 %v929, %v942
        %v970 = vmul.f32 %v930, %v946
        %v971 = vmul.f32 %v931, %v950
        %v972 = vmul.f32 %v932, %v954
        %v973 = vmul.f32 %v933, %v958
        %v974 = vmul.f32 %v934, %v962
        %v975 = vmul.f32 %v935, %v966
        %v976 = vmin.f32 %v888, %v968
        %v977 = vmin.f32 %v889, %v969
        %v978 = vmin.f32 %v890, %v970
        %v979 = vmin.f32 %v891, %v971
        %v980 = vmin.f32 %v892, %v972
        %v981 = vmin.f32 %v893, %v973
        %v982 = vmin.f32 %v894, %v974
        %v983 = vmin.f32 %v895, %v975
        %v984 = vmax.f32 %v976, 0.0
        %v985 = vmax.f32 %v977, 0.0
        %v986 = vmax.f32 %v978, 0.0
        %v987 = vmax.f32 %v979, 0.0
        %v988 = vmax.f32 %v980, 0.0
        %v989 = vmax.f32 %v981, 0.0
        %v990 = vmax.f32 %v982, 0.0
        %v991 = vmax.f32 %v983, 0.0
        %v992 = vmin.f32 %v984, 1.0
        %v993 = vmin.f32 %v985, 1.0
        %v994 = vmin.f32 %v986, 1.0
        %v995 = vmin.f32 %v987, 1.0
        %v996 = vmin.f32 %v988, 1.0
        %v997 = vmin.f32 %v989, 1.0
        %v998 = vmin.f32 %v990, 1.0
        %v999 = vmin.f32 %v991, 1.0
        %v1000 = vmul.f32 %v807, %v992
        %v1001 = vmul.f32 %v808, %v993
        %v1002 = vmul.f32 %v809, %v994
        %v1003 = vmul.f32 %v810, %v995
        %v1004 = vmul.f32 %v811, %v996
        %v1005 = vmul.f32 %v812, %v997
        %v1006 = vmul.f32 %v813, %v998
        %v1007 = vmul.f32 %v814, %v999
        %v1008 = vperm.slane %v298, 3
        %1009 = vset.pattern.permute.xlu0 3
        %1010 = vperm.xlu0 %1009, %v246
        %v1011 = vpop.permute.xlu0 %1010
        %1013 = vset.pattern.permute.xlu0 3
        %1014 = vperm.xlu0 %1013, %v247
        %v1015 = vpop.permute.xlu0 %1014
        %1017 = vset.pattern.permute.xlu0 3
        %1018 = vperm.xlu0 %1017, %v248
        %v1019 = vpop.permute.xlu0 %1018
        %1021 = vset.pattern.permute.xlu0 3
        %1022 = vperm.xlu0 %1021, %v249
        %v1023 = vpop.permute.xlu0 %1022
        %1025 = vset.pattern.permute.xlu0 3
        %1026 = vperm.xlu0 %1025, %v250
        %v1027 = vpop.permute.xlu0 %1026
        %1029 = vset.pattern.permute.xlu0 3
        %1030 = vperm.xlu0 %1029, %v251
        %v1031 = vpop.permute.xlu0 %1030
        %1033 = vset.pattern.permute.xlu0 3
        %1034 = vperm.xlu0 %1033, %v252
        %v1035 = vpop.permute.xlu0 %1034
        %1037 = vset.pattern.permute.xlu0 3
        %1038 = vperm.xlu0 %1037, %v253
        %v1039 = vpop.permute.xlu0 %1038
        %v1041 = vsub.f32 %v1008, %v1011
        %v1042 = vsub.f32 %v1008, %v1015
        %v1043 = vsub.f32 %v1008, %v1019
        %v1044 = vsub.f32 %v1008, %v1023
        %v1045 = vsub.f32 %v1008, %v1027
        %v1046 = vsub.f32 %v1008, %v1031
        %v1047 = vsub.f32 %v1008, %v1035
        %v1048 = vsub.f32 %v1008, %v1039
        %1049 = vset.pattern.permute.xlu0 3
        %1050 = vperm.xlu0 %1049, %v255
        %v1051 = vpop.permute.xlu0 %1050
        %1053 = vset.pattern.permute.xlu0 3
        %1054 = vperm.xlu0 %1053, %v256
        %v1055 = vpop.permute.xlu0 %1054
        %1057 = vset.pattern.permute.xlu0 3
        %1058 = vperm.xlu0 %1057, %v257
        %v1059 = vpop.permute.xlu0 %1058
        %1061 = vset.pattern.permute.xlu0 3
        %1062 = vperm.xlu0 %1061, %v258
        %v1063 = vpop.permute.xlu0 %1062
        %1065 = vset.pattern.permute.xlu0 3
        %1066 = vperm.xlu0 %1065, %v259
        %v1067 = vpop.permute.xlu0 %1066
        %1069 = vset.pattern.permute.xlu0 3
        %1070 = vperm.xlu0 %1069, %v260
        %v1071 = vpop.permute.xlu0 %1070
        %1073 = vset.pattern.permute.xlu0 3
        %1074 = vperm.xlu0 %1073, %v261
        %v1075 = vpop.permute.xlu0 %1074
        %1077 = vset.pattern.permute.xlu0 3
        %1078 = vperm.xlu0 %1077, %v262
        %v1079 = vpop.permute.xlu0 %1078
        %v1081 = vmul.f32 %v1041, %v1051
        %v1082 = vmul.f32 %v1042, %v1055
        %v1083 = vmul.f32 %v1043, %v1059
        %v1084 = vmul.f32 %v1044, %v1063
        %v1085 = vmul.f32 %v1045, %v1067
        %v1086 = vmul.f32 %v1046, %v1071
        %v1087 = vmul.f32 %v1047, %v1075
        %v1088 = vmul.f32 %v1048, %v1079
        %1089 = vset.pattern.permute.xlu0 3
        %1090 = vperm.xlu0 %1089, %v264
        %v1091 = vpop.permute.xlu0 %1090
        %1093 = vset.pattern.permute.xlu0 3
        %1094 = vperm.xlu0 %1093, %v265
        %v1095 = vpop.permute.xlu0 %1094
        %1097 = vset.pattern.permute.xlu0 3
        %1098 = vperm.xlu0 %1097, %v266
        %v1099 = vpop.permute.xlu0 %1098
        %1101 = vset.pattern.permute.xlu0 3
        %1102 = vperm.xlu0 %1101, %v267
        %v1103 = vpop.permute.xlu0 %1102
        %1105 = vset.pattern.permute.xlu0 3
        %1106 = vperm.xlu0 %1105, %v268
        %v1107 = vpop.permute.xlu0 %1106
        %1109 = vset.pattern.permute.xlu0 3
        %1110 = vperm.xlu0 %1109, %v269
        %v1111 = vpop.permute.xlu0 %1110
        %1113 = vset.pattern.permute.xlu0 3
        %1114 = vperm.xlu0 %1113, %v270
        %v1115 = vpop.permute.xlu0 %1114
        %1117 = vset.pattern.permute.xlu0 3
        %1118 = vperm.xlu0 %1117, %v271
        %v1119 = vpop.permute.xlu0 %1118
        %v1121 = vsub.f32 %v1091, %v1008
        %v1122 = vsub.f32 %v1095, %v1008
        %v1123 = vsub.f32 %v1099, %v1008
        %v1124 = vsub.f32 %v1103, %v1008
        %v1125 = vsub.f32 %v1107, %v1008
        %v1126 = vsub.f32 %v1111, %v1008
        %v1127 = vsub.f32 %v1115, %v1008
        %v1128 = vsub.f32 %v1119, %v1008
        %1129 = vset.pattern.permute.xlu0 3
        %1130 = vperm.xlu0 %1129, %v273
        %v1131 = vpop.permute.xlu0 %1130
        %1133 = vset.pattern.permute.xlu0 3
        %1134 = vperm.xlu0 %1133, %v274
        %v1135 = vpop.permute.xlu0 %1134
        %1137 = vset.pattern.permute.xlu0 3
        %1138 = vperm.xlu0 %1137, %v275
        %v1139 = vpop.permute.xlu0 %1138
        %1141 = vset.pattern.permute.xlu0 3
        %1142 = vperm.xlu0 %1141, %v276
        %v1143 = vpop.permute.xlu0 %1142
        %1145 = vset.pattern.permute.xlu0 3
        %1146 = vperm.xlu0 %1145, %v277
        %v1147 = vpop.permute.xlu0 %1146
        %1149 = vset.pattern.permute.xlu0 3
        %1150 = vperm.xlu0 %1149, %v278
        %v1151 = vpop.permute.xlu0 %1150
        %1153 = vset.pattern.permute.xlu0 3
        %1154 = vperm.xlu0 %1153, %v279
        %v1155 = vpop.permute.xlu0 %1154
        %1157 = vset.pattern.permute.xlu0 3
        %1158 = vperm.xlu0 %1157, %v280
        %v1159 = vpop.permute.xlu0 %1158
        %v1161 = vmul.f32 %v1121, %v1131
        %v1162 = vmul.f32 %v1122, %v1135
        %v1163 = vmul.f32 %v1123, %v1139
        %v1164 = vmul.f32 %v1124, %v1143
        %v1165 = vmul.f32 %v1125, %v1147
        %v1166 = vmul.f32 %v1126, %v1151
        %v1167 = vmul.f32 %v1127, %v1155
        %v1168 = vmul.f32 %v1128, %v1159
        %v1169 = vmin.f32 %v1081, %v1161
        %v1170 = vmin.f32 %v1082, %v1162
        %v1171 = vmin.f32 %v1083, %v1163
        %v1172 = vmin.f32 %v1084, %v1164
        %v1173 = vmin.f32 %v1085, %v1165
        %v1174 = vmin.f32 %v1086, %v1166
        %v1175 = vmin.f32 %v1087, %v1167
        %v1176 = vmin.f32 %v1088, %v1168
        %v1177 = vmax.f32 %v1169, 0.0
        %v1178 = vmax.f32 %v1170, 0.0
        %v1179 = vmax.f32 %v1171, 0.0
        %v1180 = vmax.f32 %v1172, 0.0
        %v1181 = vmax.f32 %v1173, 0.0
        %v1182 = vmax.f32 %v1174, 0.0
        %v1183 = vmax.f32 %v1175, 0.0
        %v1184 = vmax.f32 %v1176, 0.0
        %v1185 = vmin.f32 %v1177, 1.0
        %v1186 = vmin.f32 %v1178, 1.0
        %v1187 = vmin.f32 %v1179, 1.0
        %v1188 = vmin.f32 %v1180, 1.0
        %v1189 = vmin.f32 %v1181, 1.0
        %v1190 = vmin.f32 %v1182, 1.0
        %v1191 = vmin.f32 %v1183, 1.0
        %v1192 = vmin.f32 %v1184, 1.0
        %v1193 = vmul.f32 %v1000, %v1185
        %v1194 = vmul.f32 %v1001, %v1186
        %v1195 = vmul.f32 %v1002, %v1187
        %v1196 = vmul.f32 %v1003, %v1188
        %v1197 = vmul.f32 %v1004, %v1189
        %v1198 = vmul.f32 %v1005, %v1190
        %v1199 = vmul.f32 %v1006, %v1191
        %v1200 = vmul.f32 %v1007, %v1192
        %v1201 = vperm.slane %v298, 4
        %1202 = vset.pattern.permute.xlu0 4
        %1203 = vperm.xlu0 %1202, %v246
        %v1204 = vpop.permute.xlu0 %1203
        %1206 = vset.pattern.permute.xlu0 4
        %1207 = vperm.xlu0 %1206, %v247
        %v1208 = vpop.permute.xlu0 %1207
        %1210 = vset.pattern.permute.xlu0 4
        %1211 = vperm.xlu0 %1210, %v248
        %v1212 = vpop.permute.xlu0 %1211
        %1214 = vset.pattern.permute.xlu0 4
        %1215 = vperm.xlu0 %1214, %v249
        %v1216 = vpop.permute.xlu0 %1215
        %1218 = vset.pattern.permute.xlu0 4
        %1219 = vperm.xlu0 %1218, %v250
        %v1220 = vpop.permute.xlu0 %1219
        %1222 = vset.pattern.permute.xlu0 4
        %1223 = vperm.xlu0 %1222, %v251
        %v1224 = vpop.permute.xlu0 %1223
        %1226 = vset.pattern.permute.xlu0 4
        %1227 = vperm.xlu0 %1226, %v252
        %v1228 = vpop.permute.xlu0 %1227
        %1230 = vset.pattern.permute.xlu0 4
        %1231 = vperm.xlu0 %1230, %v253
        %v1232 = vpop.permute.xlu0 %1231
        %v1234 = vsub.f32 %v1201, %v1204
        %v1235 = vsub.f32 %v1201, %v1208
        %v1236 = vsub.f32 %v1201, %v1212
        %v1237 = vsub.f32 %v1201, %v1216
        %v1238 = vsub.f32 %v1201, %v1220
        %v1239 = vsub.f32 %v1201, %v1224
        %v1240 = vsub.f32 %v1201, %v1228
        %v1241 = vsub.f32 %v1201, %v1232
        %1242 = vset.pattern.permute.xlu0 4
        %1243 = vperm.xlu0 %1242, %v255
        %v1244 = vpop.permute.xlu0 %1243
        %1246 = vset.pattern.permute.xlu0 4
        %1247 = vperm.xlu0 %1246, %v256
        %v1248 = vpop.permute.xlu0 %1247
        %1250 = vset.pattern.permute.xlu0 4
        %1251 = vperm.xlu0 %1250, %v257
        %v1252 = vpop.permute.xlu0 %1251
        %1254 = vset.pattern.permute.xlu0 4
        %1255 = vperm.xlu0 %1254, %v258
        %v1256 = vpop.permute.xlu0 %1255
        %1258 = vset.pattern.permute.xlu0 4
        %1259 = vperm.xlu0 %1258, %v259
        %v1260 = vpop.permute.xlu0 %1259
        %1262 = vset.pattern.permute.xlu0 4
        %1263 = vperm.xlu0 %1262, %v260
        %v1264 = vpop.permute.xlu0 %1263
        %1266 = vset.pattern.permute.xlu0 4
        %1267 = vperm.xlu0 %1266, %v261
        %v1268 = vpop.permute.xlu0 %1267
        %1270 = vset.pattern.permute.xlu0 4
        %1271 = vperm.xlu0 %1270, %v262
        %v1272 = vpop.permute.xlu0 %1271
        %v1274 = vmul.f32 %v1234, %v1244
        %v1275 = vmul.f32 %v1235, %v1248
        %v1276 = vmul.f32 %v1236, %v1252
        %v1277 = vmul.f32 %v1237, %v1256
        %v1278 = vmul.f32 %v1238, %v1260
        %v1279 = vmul.f32 %v1239, %v1264
        %v1280 = vmul.f32 %v1240, %v1268
        %v1281 = vmul.f32 %v1241, %v1272
        %1282 = vset.pattern.permute.xlu0 4
        %1283 = vperm.xlu0 %1282, %v264
        %v1284 = vpop.permute.xlu0 %1283
        %1286 = vset.pattern.permute.xlu0 4
        %1287 = vperm.xlu0 %1286, %v265
        %v1288 = vpop.permute.xlu0 %1287
        %1290 = vset.pattern.permute.xlu0 4
        %1291 = vperm.xlu0 %1290, %v266
        %v1292 = vpop.permute.xlu0 %1291
        %1294 = vset.pattern.permute.xlu0 4
        %1295 = vperm.xlu0 %1294, %v267
        %v1296 = vpop.permute.xlu0 %1295
        %1298 = vset.pattern.permute.xlu0 4
        %1299 = vperm.xlu0 %1298, %v268
        %v1300 = vpop.permute.xlu0 %1299
        %1302 = vset.pattern.permute.xlu0 4
        %1303 = vperm.xlu0 %1302, %v269
        %v1304 = vpop.permute.xlu0 %1303
        %1306 = vset.pattern.permute.xlu0 4
        %1307 = vperm.xlu0 %1306, %v270
        %v1308 = vpop.permute.xlu0 %1307
        %1310 = vset.pattern.permute.xlu0 4
        %1311 = vperm.xlu0 %1310, %v271
        %v1312 = vpop.permute.xlu0 %1311
        %v1314 = vsub.f32 %v1284, %v1201
        %v1315 = vsub.f32 %v1288, %v1201
        %v1316 = vsub.f32 %v1292, %v1201
        %v1317 = vsub.f32 %v1296, %v1201
        %v1318 = vsub.f32 %v1300, %v1201
        %v1319 = vsub.f32 %v1304, %v1201
        %v1320 = vsub.f32 %v1308, %v1201
        %v1321 = vsub.f32 %v1312, %v1201
        %1322 = vset.pattern.permute.xlu0 4
        %1323 = vperm.xlu0 %1322, %v273
        %v1324 = vpop.permute.xlu0 %1323
        %1326 = vset.pattern.permute.xlu0 4
        %1327 = vperm.xlu0 %1326, %v274
        %v1328 = vpop.permute.xlu0 %1327
        %1330 = vset.pattern.permute.xlu0 4
        %1331 = vperm.xlu0 %1330, %v275
        %v1332 = vpop.permute.xlu0 %1331
        %1334 = vset.pattern.permute.xlu0 4
        %1335 = vperm.xlu0 %1334, %v276
        %v1336 = vpop.permute.xlu0 %1335
        %1338 = vset.pattern.permute.xlu0 4
        %1339 = vperm.xlu0 %1338, %v277
        %v1340 = vpop.permute.xlu0 %1339
        %1342 = vset.pattern.permute.xlu0 4
        %1343 = vperm.xlu0 %1342, %v278
        %v1344 = vpop.permute.xlu0 %1343
        %1346 = vset.pattern.permute.xlu0 4
        %1347 = vperm.xlu0 %1346, %v279
        %v1348 = vpop.permute.xlu0 %1347
        %1350 = vset.pattern.permute.xlu0 4
        %1351 = vperm.xlu0 %1350, %v280
        %v1352 = vpop.permute.xlu0 %1351
        %v1354 = vmul.f32 %v1314, %v1324
        %v1355 = vmul.f32 %v1315, %v1328
        %v1356 = vmul.f32 %v1316, %v1332
        %v1357 = vmul.f32 %v1317, %v1336
        %v1358 = vmul.f32 %v1318, %v1340
        %v1359 = vmul.f32 %v1319, %v1344
        %v1360 = vmul.f32 %v1320, %v1348
        %v1361 = vmul.f32 %v1321, %v1352
        %v1362 = vmin.f32 %v1274, %v1354
        %v1363 = vmin.f32 %v1275, %v1355
        %v1364 = vmin.f32 %v1276, %v1356
        %v1365 = vmin.f32 %v1277, %v1357
        %v1366 = vmin.f32 %v1278, %v1358
        %v1367 = vmin.f32 %v1279, %v1359
        %v1368 = vmin.f32 %v1280, %v1360
        %v1369 = vmin.f32 %v1281, %v1361
        %v1370 = vmax.f32 %v1362, 0.0
        %v1371 = vmax.f32 %v1363, 0.0
        %v1372 = vmax.f32 %v1364, 0.0
        %v1373 = vmax.f32 %v1365, 0.0
        %v1374 = vmax.f32 %v1366, 0.0
        %v1375 = vmax.f32 %v1367, 0.0
        %v1376 = vmax.f32 %v1368, 0.0
        %v1377 = vmax.f32 %v1369, 0.0
        %v1378 = vmin.f32 %v1370, 1.0
        %v1379 = vmin.f32 %v1371, 1.0
        %v1380 = vmin.f32 %v1372, 1.0
        %v1381 = vmin.f32 %v1373, 1.0
        %v1382 = vmin.f32 %v1374, 1.0
        %v1383 = vmin.f32 %v1375, 1.0
        %v1384 = vmin.f32 %v1376, 1.0
        %v1385 = vmin.f32 %v1377, 1.0
        %v1386 = vmul.f32 %v1193, %v1378
        %v1387 = vmul.f32 %v1194, %v1379
        %v1388 = vmul.f32 %v1195, %v1380
        %v1389 = vmul.f32 %v1196, %v1381
        %v1390 = vmul.f32 %v1197, %v1382
        %v1391 = vmul.f32 %v1198, %v1383
        %v1392 = vmul.f32 %v1199, %v1384
        %v1393 = vmul.f32 %v1200, %v1385
        %v1394 = vperm.slane %v298, 5
        %1395 = vset.pattern.permute.xlu0 5
        %1396 = vperm.xlu0 %1395, %v246
        %v1397 = vpop.permute.xlu0 %1396
        %1399 = vset.pattern.permute.xlu0 5
        %1400 = vperm.xlu0 %1399, %v247
        %v1401 = vpop.permute.xlu0 %1400
        %1403 = vset.pattern.permute.xlu0 5
        %1404 = vperm.xlu0 %1403, %v248
        %v1405 = vpop.permute.xlu0 %1404
        %1407 = vset.pattern.permute.xlu0 5
        %1408 = vperm.xlu0 %1407, %v249
        %v1409 = vpop.permute.xlu0 %1408
        %1411 = vset.pattern.permute.xlu0 5
        %1412 = vperm.xlu0 %1411, %v250
        %v1413 = vpop.permute.xlu0 %1412
        %1415 = vset.pattern.permute.xlu0 5
        %1416 = vperm.xlu0 %1415, %v251
        %v1417 = vpop.permute.xlu0 %1416
        %1419 = vset.pattern.permute.xlu0 5
        %1420 = vperm.xlu0 %1419, %v252
        %v1421 = vpop.permute.xlu0 %1420
        %1423 = vset.pattern.permute.xlu0 5
        %1424 = vperm.xlu0 %1423, %v253
        %v1425 = vpop.permute.xlu0 %1424
        %v1427 = vsub.f32 %v1394, %v1397
        %v1428 = vsub.f32 %v1394, %v1401
        %v1429 = vsub.f32 %v1394, %v1405
        %v1430 = vsub.f32 %v1394, %v1409
        %v1431 = vsub.f32 %v1394, %v1413
        %v1432 = vsub.f32 %v1394, %v1417
        %v1433 = vsub.f32 %v1394, %v1421
        %v1434 = vsub.f32 %v1394, %v1425
        %1435 = vset.pattern.permute.xlu0 5
        %1436 = vperm.xlu0 %1435, %v255
        %v1437 = vpop.permute.xlu0 %1436
        %1439 = vset.pattern.permute.xlu0 5
        %1440 = vperm.xlu0 %1439, %v256
        %v1441 = vpop.permute.xlu0 %1440
        %1443 = vset.pattern.permute.xlu0 5
        %1444 = vperm.xlu0 %1443, %v257
        %v1445 = vpop.permute.xlu0 %1444
        %1447 = vset.pattern.permute.xlu0 5
        %1448 = vperm.xlu0 %1447, %v258
        %v1449 = vpop.permute.xlu0 %1448
        %1451 = vset.pattern.permute.xlu0 5
        %1452 = vperm.xlu0 %1451, %v259
        %v1453 = vpop.permute.xlu0 %1452
        %1455 = vset.pattern.permute.xlu0 5
        %1456 = vperm.xlu0 %1455, %v260
        %v1457 = vpop.permute.xlu0 %1456
        %1459 = vset.pattern.permute.xlu0 5
        %1460 = vperm.xlu0 %1459, %v261
        %v1461 = vpop.permute.xlu0 %1460
        %1463 = vset.pattern.permute.xlu0 5
        %1464 = vperm.xlu0 %1463, %v262
        %v1465 = vpop.permute.xlu0 %1464
        %v1467 = vmul.f32 %v1427, %v1437
        %v1468 = vmul.f32 %v1428, %v1441
        %v1469 = vmul.f32 %v1429, %v1445
        %v1470 = vmul.f32 %v1430, %v1449
        %v1471 = vmul.f32 %v1431, %v1453
        %v1472 = vmul.f32 %v1432, %v1457
        %v1473 = vmul.f32 %v1433, %v1461
        %v1474 = vmul.f32 %v1434, %v1465
        %1475 = vset.pattern.permute.xlu0 5
        %1476 = vperm.xlu0 %1475, %v264
        %v1477 = vpop.permute.xlu0 %1476
        %1479 = vset.pattern.permute.xlu0 5
        %1480 = vperm.xlu0 %1479, %v265
        %v1481 = vpop.permute.xlu0 %1480
        %1483 = vset.pattern.permute.xlu0 5
        %1484 = vperm.xlu0 %1483, %v266
        %v1485 = vpop.permute.xlu0 %1484
        %1487 = vset.pattern.permute.xlu0 5
        %1488 = vperm.xlu0 %1487, %v267
        %v1489 = vpop.permute.xlu0 %1488
        %1491 = vset.pattern.permute.xlu0 5
        %1492 = vperm.xlu0 %1491, %v268
        %v1493 = vpop.permute.xlu0 %1492
        %1495 = vset.pattern.permute.xlu0 5
        %1496 = vperm.xlu0 %1495, %v269
        %v1497 = vpop.permute.xlu0 %1496
        %1499 = vset.pattern.permute.xlu0 5
        %1500 = vperm.xlu0 %1499, %v270
        %v1501 = vpop.permute.xlu0 %1500
        %1503 = vset.pattern.permute.xlu0 5
        %1504 = vperm.xlu0 %1503, %v271
        %v1505 = vpop.permute.xlu0 %1504
        %v1507 = vsub.f32 %v1477, %v1394
        %v1508 = vsub.f32 %v1481, %v1394
        %v1509 = vsub.f32 %v1485, %v1394
        %v1510 = vsub.f32 %v1489, %v1394
        %v1511 = vsub.f32 %v1493, %v1394
        %v1512 = vsub.f32 %v1497, %v1394
        %v1513 = vsub.f32 %v1501, %v1394
        %v1514 = vsub.f32 %v1505, %v1394
        %1515 = vset.pattern.permute.xlu0 5
        %1516 = vperm.xlu0 %1515, %v273
        %v1517 = vpop.permute.xlu0 %1516
        %1519 = vset.pattern.permute.xlu0 5
        %1520 = vperm.xlu0 %1519, %v274
        %v1521 = vpop.permute.xlu0 %1520
        %1523 = vset.pattern.permute.xlu0 5
        %1524 = vperm.xlu0 %1523, %v275
        %v1525 = vpop.permute.xlu0 %1524
        %1527 = vset.pattern.permute.xlu0 5
        %1528 = vperm.xlu0 %1527, %v276
        %v1529 = vpop.permute.xlu0 %1528
        %1531 = vset.pattern.permute.xlu0 5
        %1532 = vperm.xlu0 %1531, %v277
        %v1533 = vpop.permute.xlu0 %1532
        %1535 = vset.pattern.permute.xlu0 5
        %1536 = vperm.xlu0 %1535, %v278
        %v1537 = vpop.permute.xlu0 %1536
        %1539 = vset.pattern.permute.xlu0 5
        %1540 = vperm.xlu0 %1539, %v279
        %v1541 = vpop.permute.xlu0 %1540
        %1543 = vset.pattern.permute.xlu0 5
        %1544 = vperm.xlu0 %1543, %v280
        %v1545 = vpop.permute.xlu0 %1544
        %v1547 = vmul.f32 %v1507, %v1517
        %v1548 = vmul.f32 %v1508, %v1521
        %v1549 = vmul.f32 %v1509, %v1525
        %v1550 = vmul.f32 %v1510, %v1529
        %v1551 = vmul.f32 %v1511, %v1533
        %v1552 = vmul.f32 %v1512, %v1537
        %v1553 = vmul.f32 %v1513, %v1541
        %v1554 = vmul.f32 %v1514, %v1545
        %v1555 = vmin.f32 %v1467, %v1547
        %v1556 = vmin.f32 %v1468, %v1548
        %v1557 = vmin.f32 %v1469, %v1549
        %v1558 = vmin.f32 %v1470, %v1550
        %v1559 = vmin.f32 %v1471, %v1551
        %v1560 = vmin.f32 %v1472, %v1552
        %v1561 = vmin.f32 %v1473, %v1553
        %v1562 = vmin.f32 %v1474, %v1554
        %v1563 = vmax.f32 %v1555, 0.0
        %v1564 = vmax.f32 %v1556, 0.0
        %v1565 = vmax.f32 %v1557, 0.0
        %v1566 = vmax.f32 %v1558, 0.0
        %v1567 = vmax.f32 %v1559, 0.0
        %v1568 = vmax.f32 %v1560, 0.0
        %v1569 = vmax.f32 %v1561, 0.0
        %v1570 = vmax.f32 %v1562, 0.0
        %v1571 = vmin.f32 %v1563, 1.0
        %v1572 = vmin.f32 %v1564, 1.0
        %v1573 = vmin.f32 %v1565, 1.0
        %v1574 = vmin.f32 %v1566, 1.0
        %v1575 = vmin.f32 %v1567, 1.0
        %v1576 = vmin.f32 %v1568, 1.0
        %v1577 = vmin.f32 %v1569, 1.0
        %v1578 = vmin.f32 %v1570, 1.0
        %v1579 = vmul.f32 %v1386, %v1571
        %v1580 = vmul.f32 %v1387, %v1572
        %v1581 = vmul.f32 %v1388, %v1573
        %v1582 = vmul.f32 %v1389, %v1574
        %v1583 = vmul.f32 %v1390, %v1575
        %v1584 = vmul.f32 %v1391, %v1576
        %v1585 = vmul.f32 %v1392, %v1577
        %v1586 = vmul.f32 %v1393, %v1578
        %v1587 = vperm.slane %v298, 6
        %1588 = vset.pattern.permute.xlu0 6
        %1589 = vperm.xlu0 %1588, %v246
        %v1590 = vpop.permute.xlu0 %1589
        %1592 = vset.pattern.permute.xlu0 6
        %1593 = vperm.xlu0 %1592, %v247
        %v1594 = vpop.permute.xlu0 %1593
        %1596 = vset.pattern.permute.xlu0 6
        %1597 = vperm.xlu0 %1596, %v248
        %v1598 = vpop.permute.xlu0 %1597
        %1600 = vset.pattern.permute.xlu0 6
        %1601 = vperm.xlu0 %1600, %v249
        %v1602 = vpop.permute.xlu0 %1601
        %1604 = vset.pattern.permute.xlu0 6
        %1605 = vperm.xlu0 %1604, %v250
        %v1606 = vpop.permute.xlu0 %1605
        %1608 = vset.pattern.permute.xlu0 6
        %1609 = vperm.xlu0 %1608, %v251
        %v1610 = vpop.permute.xlu0 %1609
        %1612 = vset.pattern.permute.xlu0 6
        %1613 = vperm.xlu0 %1612, %v252
        %v1614 = vpop.permute.xlu0 %1613
        %1616 = vset.pattern.permute.xlu0 6
        %1617 = vperm.xlu0 %1616, %v253
        %v1618 = vpop.permute.xlu0 %1617
        %v1620 = vsub.f32 %v1587, %v1590
        %v1621 = vsub.f32 %v1587, %v1594
        %v1622 = vsub.f32 %v1587, %v1598
        %v1623 = vsub.f32 %v1587, %v1602
        %v1624 = vsub.f32 %v1587, %v1606
        %v1625 = vsub.f32 %v1587, %v1610
        %v1626 = vsub.f32 %v1587, %v1614
        %v1627 = vsub.f32 %v1587, %v1618
        %1628 = vset.pattern.permute.xlu0 6
        %1629 = vperm.xlu0 %1628, %v255
        %v1630 = vpop.permute.xlu0 %1629
        %1632 = vset.pattern.permute.xlu0 6
        %1633 = vperm.xlu0 %1632, %v256
        %v1634 = vpop.permute.xlu0 %1633
        %1636 = vset.pattern.permute.xlu0 6
        %1637 = vperm.xlu0 %1636, %v257
        %v1638 = vpop.permute.xlu0 %1637
        %1640 = vset.pattern.permute.xlu0 6
        %1641 = vperm.xlu0 %1640, %v258
        %v1642 = vpop.permute.xlu0 %1641
        %1644 = vset.pattern.permute.xlu0 6
        %1645 = vperm.xlu0 %1644, %v259
        %v1646 = vpop.permute.xlu0 %1645
        %1648 = vset.pattern.permute.xlu0 6
        %1649 = vperm.xlu0 %1648, %v260
        %v1650 = vpop.permute.xlu0 %1649
        %1652 = vset.pattern.permute.xlu0 6
        %1653 = vperm.xlu0 %1652, %v261
        %v1654 = vpop.permute.xlu0 %1653
        %1656 = vset.pattern.permute.xlu0 6
        %1657 = vperm.xlu0 %1656, %v262
        %v1658 = vpop.permute.xlu0 %1657
        %v1660 = vmul.f32 %v1620, %v1630
        %v1661 = vmul.f32 %v1621, %v1634
        %v1662 = vmul.f32 %v1622, %v1638
        %v1663 = vmul.f32 %v1623, %v1642
        %v1664 = vmul.f32 %v1624, %v1646
        %v1665 = vmul.f32 %v1625, %v1650
        %v1666 = vmul.f32 %v1626, %v1654
        %v1667 = vmul.f32 %v1627, %v1658
        %1668 = vset.pattern.permute.xlu0 6
        %1669 = vperm.xlu0 %1668, %v264
        %v1670 = vpop.permute.xlu0 %1669
        %1672 = vset.pattern.permute.xlu0 6
        %1673 = vperm.xlu0 %1672, %v265
        %v1674 = vpop.permute.xlu0 %1673
        %1676 = vset.pattern.permute.xlu0 6
        %1677 = vperm.xlu0 %1676, %v266
        %v1678 = vpop.permute.xlu0 %1677
        %1680 = vset.pattern.permute.xlu0 6
        %1681 = vperm.xlu0 %1680, %v267
        %v1682 = vpop.permute.xlu0 %1681
        %1684 = vset.pattern.permute.xlu0 6
        %1685 = vperm.xlu0 %1684, %v268
        %v1686 = vpop.permute.xlu0 %1685
        %1688 = vset.pattern.permute.xlu0 6
        %1689 = vperm.xlu0 %1688, %v269
        %v1690 = vpop.permute.xlu0 %1689
        %1692 = vset.pattern.permute.xlu0 6
        %1693 = vperm.xlu0 %1692, %v270
        %v1694 = vpop.permute.xlu0 %1693
        %1696 = vset.pattern.permute.xlu0 6
        %1697 = vperm.xlu0 %1696, %v271
        %v1698 = vpop.permute.xlu0 %1697
        %v1700 = vsub.f32 %v1670, %v1587
        %v1701 = vsub.f32 %v1674, %v1587
        %v1702 = vsub.f32 %v1678, %v1587
        %v1703 = vsub.f32 %v1682, %v1587
        %v1704 = vsub.f32 %v1686, %v1587
        %v1705 = vsub.f32 %v1690, %v1587
        %v1706 = vsub.f32 %v1694, %v1587
        %v1707 = vsub.f32 %v1698, %v1587
        %1708 = vset.pattern.permute.xlu0 6
        %1709 = vperm.xlu0 %1708, %v273
        %v1710 = vpop.permute.xlu0 %1709
        %1712 = vset.pattern.permute.xlu0 6
        %1713 = vperm.xlu0 %1712, %v274
        %v1714 = vpop.permute.xlu0 %1713
        %1716 = vset.pattern.permute.xlu0 6
        %1717 = vperm.xlu0 %1716, %v275
        %v1718 = vpop.permute.xlu0 %1717
        %1720 = vset.pattern.permute.xlu0 6
        %1721 = vperm.xlu0 %1720, %v276
        %v1722 = vpop.permute.xlu0 %1721
        %1724 = vset.pattern.permute.xlu0 6
        %1725 = vperm.xlu0 %1724, %v277
        %v1726 = vpop.permute.xlu0 %1725
        %1728 = vset.pattern.permute.xlu0 6
        %1729 = vperm.xlu0 %1728, %v278
        %v1730 = vpop.permute.xlu0 %1729
        %1732 = vset.pattern.permute.xlu0 6
        %1733 = vperm.xlu0 %1732, %v279
        %v1734 = vpop.permute.xlu0 %1733
        %1736 = vset.pattern.permute.xlu0 6
        %1737 = vperm.xlu0 %1736, %v280
        %v1738 = vpop.permute.xlu0 %1737
        %v1740 = vmul.f32 %v1700, %v1710
        %v1741 = vmul.f32 %v1701, %v1714
        %v1742 = vmul.f32 %v1702, %v1718
        %v1743 = vmul.f32 %v1703, %v1722
        %v1744 = vmul.f32 %v1704, %v1726
        %v1745 = vmul.f32 %v1705, %v1730
        %v1746 = vmul.f32 %v1706, %v1734
        %v1747 = vmul.f32 %v1707, %v1738
        %v1748 = vmin.f32 %v1660, %v1740
        %v1749 = vmin.f32 %v1661, %v1741
        %v1750 = vmin.f32 %v1662, %v1742
        %v1751 = vmin.f32 %v1663, %v1743
        %v1752 = vmin.f32 %v1664, %v1744
        %v1753 = vmin.f32 %v1665, %v1745
        %v1754 = vmin.f32 %v1666, %v1746
        %v1755 = vmin.f32 %v1667, %v1747
        %v1756 = vmax.f32 %v1748, 0.0
        %v1757 = vmax.f32 %v1749, 0.0
        %v1758 = vmax.f32 %v1750, 0.0
        %v1759 = vmax.f32 %v1751, 0.0
        %v1760 = vmax.f32 %v1752, 0.0
        %v1761 = vmax.f32 %v1753, 0.0
        %v1762 = vmax.f32 %v1754, 0.0
        %v1763 = vmax.f32 %v1755, 0.0
        %v1764 = vmin.f32 %v1756, 1.0
        %v1765 = vmin.f32 %v1757, 1.0
        %v1766 = vmin.f32 %v1758, 1.0
        %v1767 = vmin.f32 %v1759, 1.0
        %v1768 = vmin.f32 %v1760, 1.0
        %v1769 = vmin.f32 %v1761, 1.0
        %v1770 = vmin.f32 %v1762, 1.0
        %v1771 = vmin.f32 %v1763, 1.0
        %v1772 = vmul.f32 %v1579, %v1764
        %v1773 = vmul.f32 %v1580, %v1765
        %v1774 = vmul.f32 %v1581, %v1766
        %v1775 = vmul.f32 %v1582, %v1767
        %v1776 = vmul.f32 %v1583, %v1768
        %v1777 = vmul.f32 %v1584, %v1769
        %v1778 = vmul.f32 %v1585, %v1770
        %v1779 = vmul.f32 %v1586, %v1771
        %v1780 = vperm.slane %v298, 7
        %1781 = vset.pattern.permute.xlu0 7
        %1782 = vperm.xlu0 %1781, %v246
        %v1783 = vpop.permute.xlu0 %1782
        %1785 = vset.pattern.permute.xlu0 7
        %1786 = vperm.xlu0 %1785, %v247
        %v1787 = vpop.permute.xlu0 %1786
        %1789 = vset.pattern.permute.xlu0 7
        %1790 = vperm.xlu0 %1789, %v248
        %v1791 = vpop.permute.xlu0 %1790
        %1793 = vset.pattern.permute.xlu0 7
        %1794 = vperm.xlu0 %1793, %v249
        %v1795 = vpop.permute.xlu0 %1794
        %1797 = vset.pattern.permute.xlu0 7
        %1798 = vperm.xlu0 %1797, %v250
        %v1799 = vpop.permute.xlu0 %1798
        %1801 = vset.pattern.permute.xlu0 7
        %1802 = vperm.xlu0 %1801, %v251
        %v1803 = vpop.permute.xlu0 %1802
        %1805 = vset.pattern.permute.xlu0 7
        %1806 = vperm.xlu0 %1805, %v252
        %v1807 = vpop.permute.xlu0 %1806
        %1809 = vset.pattern.permute.xlu0 7
        %1810 = vperm.xlu0 %1809, %v253
        %v1811 = vpop.permute.xlu0 %1810
        %v1813 = vsub.f32 %v1780, %v1783
        %v1814 = vsub.f32 %v1780, %v1787
        %v1815 = vsub.f32 %v1780, %v1791
        %v1816 = vsub.f32 %v1780, %v1795
        %v1817 = vsub.f32 %v1780, %v1799
        %v1818 = vsub.f32 %v1780, %v1803
        %v1819 = vsub.f32 %v1780, %v1807
        %v1820 = vsub.f32 %v1780, %v1811
        %1821 = vset.pattern.permute.xlu0 7
        %1822 = vperm.xlu0 %1821, %v255
        %v1823 = vpop.permute.xlu0 %1822
        %1825 = vset.pattern.permute.xlu0 7
        %1826 = vperm.xlu0 %1825, %v256
        %v1827 = vpop.permute.xlu0 %1826
        %1829 = vset.pattern.permute.xlu0 7
        %1830 = vperm.xlu0 %1829, %v257
        %v1831 = vpop.permute.xlu0 %1830
        %1833 = vset.pattern.permute.xlu0 7
        %1834 = vperm.xlu0 %1833, %v258
        %v1835 = vpop.permute.xlu0 %1834
        %1837 = vset.pattern.permute.xlu0 7
        %1838 = vperm.xlu0 %1837, %v259
        %v1839 = vpop.permute.xlu0 %1838
        %1841 = vset.pattern.permute.xlu0 7
        %1842 = vperm.xlu0 %1841, %v260
        %v1843 = vpop.permute.xlu0 %1842
        %1845 = vset.pattern.permute.xlu0 7
        %1846 = vperm.xlu0 %1845, %v261
        %v1847 = vpop.permute.xlu0 %1846
        %1849 = vset.pattern.permute.xlu0 7
        %1850 = vperm.xlu0 %1849, %v262
        %v1851 = vpop.permute.xlu0 %1850
        %v1853 = vmul.f32 %v1813, %v1823
        %v1854 = vmul.f32 %v1814, %v1827
        %v1855 = vmul.f32 %v1815, %v1831
        %v1856 = vmul.f32 %v1816, %v1835
        %v1857 = vmul.f32 %v1817, %v1839
        %v1858 = vmul.f32 %v1818, %v1843
        %v1859 = vmul.f32 %v1819, %v1847
        %v1860 = vmul.f32 %v1820, %v1851
        %1861 = vset.pattern.permute.xlu0 7
        %1862 = vperm.xlu0 %1861, %v264
        %v1863 = vpop.permute.xlu0 %1862
        %1865 = vset.pattern.permute.xlu0 7
        %1866 = vperm.xlu0 %1865, %v265
        %v1867 = vpop.permute.xlu0 %1866
        %1869 = vset.pattern.permute.xlu0 7
        %1870 = vperm.xlu0 %1869, %v266
        %v1871 = vpop.permute.xlu0 %1870
        %1873 = vset.pattern.permute.xlu0 7
        %1874 = vperm.xlu0 %1873, %v267
        %v1875 = vpop.permute.xlu0 %1874
        %1877 = vset.pattern.permute.xlu0 7
        %1878 = vperm.xlu0 %1877, %v268
        %v1879 = vpop.permute.xlu0 %1878
        %1881 = vset.pattern.permute.xlu0 7
        %1882 = vperm.xlu0 %1881, %v269
        %v1883 = vpop.permute.xlu0 %1882
        %1885 = vset.pattern.permute.xlu0 7
        %1886 = vperm.xlu0 %1885, %v270
        %v1887 = vpop.permute.xlu0 %1886
        %1889 = vset.pattern.permute.xlu0 7
        %1890 = vperm.xlu0 %1889, %v271
        %v1891 = vpop.permute.xlu0 %1890
        %v1893 = vsub.f32 %v1863, %v1780
        %v1894 = vsub.f32 %v1867, %v1780
        %v1895 = vsub.f32 %v1871, %v1780
        %v1896 = vsub.f32 %v1875, %v1780
        %v1897 = vsub.f32 %v1879, %v1780
        %v1898 = vsub.f32 %v1883, %v1780
        %v1899 = vsub.f32 %v1887, %v1780
        %v1900 = vsub.f32 %v1891, %v1780
        %1901 = vset.pattern.permute.xlu0 7
        %1902 = vperm.xlu0 %1901, %v273
        %v1903 = vpop.permute.xlu0 %1902
        %1905 = vset.pattern.permute.xlu0 7
        %1906 = vperm.xlu0 %1905, %v274
        %v1907 = vpop.permute.xlu0 %1906
        %1909 = vset.pattern.permute.xlu0 7
        %1910 = vperm.xlu0 %1909, %v275
        %v1911 = vpop.permute.xlu0 %1910
        %1913 = vset.pattern.permute.xlu0 7
        %1914 = vperm.xlu0 %1913, %v276
        %v1915 = vpop.permute.xlu0 %1914
        %1917 = vset.pattern.permute.xlu0 7
        %1918 = vperm.xlu0 %1917, %v277
        %v1919 = vpop.permute.xlu0 %1918
        %1921 = vset.pattern.permute.xlu0 7
        %1922 = vperm.xlu0 %1921, %v278
        %v1923 = vpop.permute.xlu0 %1922
        %1925 = vset.pattern.permute.xlu0 7
        %1926 = vperm.xlu0 %1925, %v279
        %v1927 = vpop.permute.xlu0 %1926
        %1929 = vset.pattern.permute.xlu0 7
        %1930 = vperm.xlu0 %1929, %v280
        %v1931 = vpop.permute.xlu0 %1930
        %v1933 = vmul.f32 %v1893, %v1903
        %v1934 = vmul.f32 %v1894, %v1907
        %v1935 = vmul.f32 %v1895, %v1911
        %v1936 = vmul.f32 %v1896, %v1915
        %v1937 = vmul.f32 %v1897, %v1919
        %v1938 = vmul.f32 %v1898, %v1923
        %v1939 = vmul.f32 %v1899, %v1927
        %v1940 = vmul.f32 %v1900, %v1931
        %v1941 = vmin.f32 %v1853, %v1933
        %v1942 = vmin.f32 %v1854, %v1934
        %v1943 = vmin.f32 %v1855, %v1935
        %v1944 = vmin.f32 %v1856, %v1936
        %v1945 = vmin.f32 %v1857, %v1937
        %v1946 = vmin.f32 %v1858, %v1938
        %v1947 = vmin.f32 %v1859, %v1939
        %v1948 = vmin.f32 %v1860, %v1940
        %v1949 = vmax.f32 %v1941, 0.0
        %v1950 = vmax.f32 %v1942, 0.0
        %v1951 = vmax.f32 %v1943, 0.0
        %v1952 = vmax.f32 %v1944, 0.0
        %v1953 = vmax.f32 %v1945, 0.0
        %v1954 = vmax.f32 %v1946, 0.0
        %v1955 = vmax.f32 %v1947, 0.0
        %v1956 = vmax.f32 %v1948, 0.0
        %v1957 = vmin.f32 %v1949, 1.0
        %v1958 = vmin.f32 %v1950, 1.0
        %v1959 = vmin.f32 %v1951, 1.0
        %v1960 = vmin.f32 %v1952, 1.0
        %v1961 = vmin.f32 %v1953, 1.0
        %v1962 = vmin.f32 %v1954, 1.0
        %v1963 = vmin.f32 %v1955, 1.0
        %v1964 = vmin.f32 %v1956, 1.0
        %v1965 = vmul.f32 %v1772, %v1957
        %v1966 = vmul.f32 %v1773, %v1958
        %v1967 = vmul.f32 %v1774, %v1959
        %v1968 = vmul.f32 %v1775, %v1960
        %v1969 = vmul.f32 %v1776, %v1961
        %v1970 = vmul.f32 %v1777, %v1962
        %v1971 = vmul.f32 %v1778, %v1963
        %v1972 = vmul.f32 %v1779, %v1964
        %v1973 = vmul.f32 %v382, %v1965
        %v1974 = vmul.f32 %v385, %v1966
        %v1975 = vmul.f32 %v388, %v1967
        %v1976 = vmul.f32 %v391, %v1968
        %v1977 = vmul.f32 %v394, %v1969
        %v1978 = vmul.f32 %v397, %v1970
        %v1979 = vmul.f32 %v400, %v1971
        %v1980 = vmul.f32 %v403, %v1972
        %vm1981 = vcmask 523264
        %v1983 = vsel %vm1981, %v297, 0
        %1985 = vmatpush.msra.mxu0 0.0
        %1986 = vmatpush.msra.mxu0 0.0
        %1987 = vmatpush.msra.mxu0 0.0
        %1988 = vmatpush.msra.mxu0 0.0
        %1989 = vmatpush.msra.mxu0 0.0
        %1990 = vmatpush.msra.mxu0 0.0
        %1991 = vmatpush.msra.mxu0 0.0
        %1992 = vmatpush.msra.mxu0 0.0
        %1993 = vmatpush.msra.mxu0 %v1980
        %1994 = vmatpush.msra.mxu0 %v1979
        %1995 = vmatpush.msra.mxu0 %v1978
        %1996 = vmatpush.msra.mxu0 %v1977
        %1997 = vmatpush.msra.mxu0 %v1976
        %1998 = vmatpush.msra.mxu0 %v1975
        %1999 = vmatpush.msra.mxu0 %v1974
        %2000 = vmatpush.msra.mxu0 %v1973
        %2001 = vmatmul.f32.gmra.mxu0 %v1983
        %v2002 = vpop.f32.mrf.mxu0
        %v2003 = vadd.f32 0.0, %v2002
        %2004 = vdwg.mxu0
        %2005 = vmatpush.msra.mxu0 0.0
        %2006 = vmatpush.msra.mxu0 0.0
        %2007 = vmatpush.msra.mxu0 0.0
        %2008 = vmatpush.msra.mxu0 0.0
        %2009 = vmatpush.msra.mxu0 0.0
        %2010 = vmatpush.msra.mxu0 0.0
        %2011 = vmatpush.msra.mxu0 0.0
        %2012 = vmatpush.msra.mxu0 0.0
        %2013 = vmatpush.msra.mxu0 %v1972
        %2014 = vmatpush.msra.mxu0 %v1971
        %2015 = vmatpush.msra.mxu0 %v1970
        %2016 = vmatpush.msra.mxu0 %v1969
        %2017 = vmatpush.msra.mxu0 %v1968
        %2018 = vmatpush.msra.mxu0 %v1967
        %2019 = vmatpush.msra.mxu0 %v1966
        %2020 = vmatpush.msra.mxu0 %v1965
        %2021 = vmatmul.f32.gmra.mxu0 %v1983
        %v2022 = vpop.f32.mrf.mxu0
        %v2023 = vadd.f32 1e-13, %v2022
        %2024 = vdwg.mxu0
        %v2025 = vrcp.pop %v2023
        %v2026 = vmul.f32 %v2023, %v2025
        %v2027 = vsub.f32 1.0, %v2026
        %v2028 = vmul.f32 %v2025, %v2027
        %v2029 = vadd.f32 %v2025, %v2028
        %vm2030 = vweird.f32 %v2023
        %vm2031 = vweird.f32 %v2025
        %vm2032 = vmor %vm2030, %vm2031
        %v2033 = vsel %vm2032, %v2025, %v2029
        %v2034 = vand.u32 2147483647, %v2023
        %vm2035 = vcmp.eq.f32.partialorder %v2034, 8.507059e+37
        %v2036 = vand.u32 %v2023, 2147483648
        %v2037 = vor.u32 1.1754944e-38, %v2036
        %v2038 = vsel %vm2035, %v2037, %v2033
        %v2039 = vmul.f32 %v2003, %v2038
        %2040 = vst [vmem:[%s230] sm:$0xff] %v2039
        %v2041 = vld [vmem:[%s239 + $0x8] sm:$0xff]
        %2042 = vmatpush.msra.mxu0 0.0
        %2043 = vmatpush.msra.mxu0 0.0
        %2044 = vmatpush.msra.mxu0 0.0
        %2045 = vmatpush.msra.mxu0 0.0
        %2046 = vmatpush.msra.mxu0 0.0
        %2047 = vmatpush.msra.mxu0 0.0
        %2048 = vmatpush.msra.mxu0 0.0
        %2049 = vmatpush.msra.mxu0 0.0
        %2050 = vmatpush.msra.mxu0 0.0
        %2051 = vmatpush.msra.mxu0 0.0
        %2052 = vmatpush.msra.mxu0 0.0
        %2053 = vmatpush.msra.mxu0 0.0
        %2054 = vmatpush.msra.mxu0 0.0
        %2055 = vmatpush.msra.mxu0 0.0
        %2056 = vmatpush.msra.mxu0 0.0
        %2057 = vmatpush.msra.mxu0 %v2041
        %2058 = vmatmul.f32.gmra.mxu0 %v341
        %v2059 = vpop.f32.mrf.mxu0
        %v2060 = vadd.f32 %v302, %v2059
        %2061 = vmatmul.f32.gmra.mxu0 %v344
        %v2062 = vpop.f32.mrf.mxu0
        %v2063 = vadd.f32 %v307, %v2062
        %2064 = vmatmul.f32.gmra.mxu0 %v347
        %v2065 = vpop.f32.mrf.mxu0
        %v2066 = vadd.f32 %v312, %v2065
        %2067 = vmatmul.f32.gmra.mxu0 %v350
        %v2068 = vpop.f32.mrf.mxu0
        %v2069 = vadd.f32 %v317, %v2068
        %2070 = vmatmul.f32.gmra.mxu0 %v353
        %v2071 = vpop.f32.mrf.mxu0
        %v2072 = vadd.f32 %v322, %v2071
        %2073 = vmatmul.f32.gmra.mxu0 %v356
        %v2074 = vpop.f32.mrf.mxu0
        %v2075 = vadd.f32 %v327, %v2074
        %2076 = vmatmul.f32.gmra.mxu0 %v359
        %v2077 = vpop.f32.mrf.mxu0
        %v2078 = vadd.f32 %v332, %v2077
        %2079 = vmatmul.f32.gmra.mxu0 %v362
        %v2080 = vpop.f32.mrf.mxu0
        %v2081 = vadd.f32 %v337, %v2080
        %2082 = vdwg.mxu0
        %v2083 = vperm.slane %v2041, 0
        %v2084 = vsub.f32 %v2083, %v409
        %v2085 = vsub.f32 %v2083, %v414
        %v2086 = vsub.f32 %v2083, %v419
        %v2087 = vsub.f32 %v2083, %v424
        %v2088 = vsub.f32 %v2083, %v429
        %v2089 = vsub.f32 %v2083, %v434
        %v2090 = vsub.f32 %v2083, %v439
        %v2091 = vsub.f32 %v2083, %v444
        %v2092 = vmul.f32 %v2084, %v457
        %v2093 = vmul.f32 %v2085, %v462
        %v2094 = vmul.f32 %v2086, %v467
        %v2095 = vmul.f32 %v2087, %v472
        %v2096 = vmul.f32 %v2088, %v477
        %v2097 = vmul.f32 %v2089, %v482
        %v2098 = vmul.f32 %v2090, %v487
        %v2099 = vmul.f32 %v2091, %v492
        %v2100 = vsub.f32 %v505, %v2083
        %v2101 = vsub.f32 %v510, %v2083
        %v2102 = vsub.f32 %v515, %v2083
        %v2103 = vsub.f32 %v520, %v2083
        %v2104 = vsub.f32 %v525, %v2083
        %v2105 = vsub.f32 %v530, %v2083
        %v2106 = vsub.f32 %v535, %v2083
        %v2107 = vsub.f32 %v540, %v2083
        %v2108 = vmul.f32 %v2100, %v553
        %v2109 = vmul.f32 %v2101, %v558
        %v2110 = vmul.f32 %v2102, %v563
        %v2111 = vmul.f32 %v2103, %v568
        %v2112 = vmul.f32 %v2104, %v573
        %v2113 = vmul.f32 %v2105, %v578
        %v2114 = vmul.f32 %v2106, %v583
        %v2115 = vmul.f32 %v2107, %v588
        %v2116 = vmin.f32 %v2092, %v2108
        %v2117 = vmin.f32 %v2093, %v2109
        %v2118 = vmin.f32 %v2094, %v2110
        %v2119 = vmin.f32 %v2095, %v2111
        %v2120 = vmin.f32 %v2096, %v2112
        %v2121 = vmin.f32 %v2097, %v2113
        %v2122 = vmin.f32 %v2098, %v2114
        %v2123 = vmin.f32 %v2099, %v2115
        %v2124 = vmax.f32 %v2116, 0.0
        %v2125 = vmax.f32 %v2117, 0.0
        %v2126 = vmax.f32 %v2118, 0.0
        %v2127 = vmax.f32 %v2119, 0.0
        %v2128 = vmax.f32 %v2120, 0.0
        %v2129 = vmax.f32 %v2121, 0.0
        %v2130 = vmax.f32 %v2122, 0.0
        %v2131 = vmax.f32 %v2123, 0.0
        %v2132 = vmin.f32 %v2124, 1.0
        %v2133 = vmin.f32 %v2125, 1.0
        %v2134 = vmin.f32 %v2126, 1.0
        %v2135 = vmin.f32 %v2127, 1.0
        %v2136 = vmin.f32 %v2128, 1.0
        %v2137 = vmin.f32 %v2129, 1.0
        %v2138 = vmin.f32 %v2130, 1.0
        %v2139 = vmin.f32 %v2131, 1.0
        %v2140 = vperm.slane %v2041, 1
        %v2141 = vsub.f32 %v2140, %v625
        %v2142 = vsub.f32 %v2140, %v629
        %v2143 = vsub.f32 %v2140, %v633
        %v2144 = vsub.f32 %v2140, %v637
        %v2145 = vsub.f32 %v2140, %v641
        %v2146 = vsub.f32 %v2140, %v645
        %v2147 = vsub.f32 %v2140, %v649
        %v2148 = vsub.f32 %v2140, %v653
        %v2149 = vmul.f32 %v2141, %v665
        %v2150 = vmul.f32 %v2142, %v669
        %v2151 = vmul.f32 %v2143, %v673
        %v2152 = vmul.f32 %v2144, %v677
        %v2153 = vmul.f32 %v2145, %v681
        %v2154 = vmul.f32 %v2146, %v685
        %v2155 = vmul.f32 %v2147, %v689
        %v2156 = vmul.f32 %v2148, %v693
        %v2157 = vsub.f32 %v705, %v2140
        %v2158 = vsub.f32 %v709, %v2140
        %v2159 = vsub.f32 %v713, %v2140
        %v2160 = vsub.f32 %v717, %v2140
        %v2161 = vsub.f32 %v721, %v2140
        %v2162 = vsub.f32 %v725, %v2140
        %v2163 = vsub.f32 %v729, %v2140
        %v2164 = vsub.f32 %v733, %v2140
        %v2165 = vmul.f32 %v2157, %v745
        %v2166 = vmul.f32 %v2158, %v749
        %v2167 = vmul.f32 %v2159, %v753
        %v2168 = vmul.f32 %v2160, %v757
        %v2169 = vmul.f32 %v2161, %v761
        %v2170 = vmul.f32 %v2162, %v765
        %v2171 = vmul.f32 %v2163, %v769
        %v2172 = vmul.f32 %v2164, %v773
        %v2173 = vmin.f32 %v2149, %v2165
        %v2174 = vmin.f32 %v2150, %v2166
        %v2175 = vmin.f32 %v2151, %v2167
        %v2176 = vmin.f32 %v2152, %v2168
        %v2177 = vmin.f32 %v2153, %v2169
        %v2178 = vmin.f32 %v2154, %v2170
        %v2179 = vmin.f32 %v2155, %v2171
        %v2180 = vmin.f32 %v2156, %v2172
        %v2181 = vmax.f32 %v2173, 0.0
        %v2182 = vmax.f32 %v2174, 0.0
        %v2183 = vmax.f32 %v2175, 0.0
        %v2184 = vmax.f32 %v2176, 0.0
        %v2185 = vmax.f32 %v2177, 0.0
        %v2186 = vmax.f32 %v2178, 0.0
        %v2187 = vmax.f32 %v2179, 0.0
        %v2188 = vmax.f32 %v2180, 0.0
        %v2189 = vmin.f32 %v2181, 1.0
        %v2190 = vmin.f32 %v2182, 1.0
        %v2191 = vmin.f32 %v2183, 1.0
        %v2192 = vmin.f32 %v2184, 1.0
        %v2193 = vmin.f32 %v2185, 1.0
        %v2194 = vmin.f32 %v2186, 1.0
        %v2195 = vmin.f32 %v2187, 1.0
        %v2196 = vmin.f32 %v2188, 1.0
        %v2197 = vmul.f32 %v2132, %v2189
        %v2198 = vmul.f32 %v2133, %v2190
        %v2199 = vmul.f32 %v2134, %v2191
        %v2200 = vmul.f32 %v2135, %v2192
        %v2201 = vmul.f32 %v2136, %v2193
        %v2202 = vmul.f32 %v2137, %v2194
        %v2203 = vmul.f32 %v2138, %v2195
        %v2204 = vmul.f32 %v2139, %v2196
        %v2205 = vperm.slane %v2041, 2
        %v2206 = vsub.f32 %v2205, %v818
        %v2207 = vsub.f32 %v2205, %v822
        %v2208 = vsub.f32 %v2205, %v826
        %v2209 = vsub.f32 %v2205, %v830
        %v2210 = vsub.f32 %v2205, %v834
        %v2211 = vsub.f32 %v2205, %v838
        %v2212 = vsub.f32 %v2205, %v842
        %v2213 = vsub.f32 %v2205, %v846
        %v2214 = vmul.f32 %v2206, %v858
        %v2215 = vmul.f32 %v2207, %v862
        %v2216 = vmul.f32 %v2208, %v866
        %v2217 = vmul.f32 %v2209, %v870
        %v2218 = vmul.f32 %v2210, %v874
        %v2219 = vmul.f32 %v2211, %v878
        %v2220 = vmul.f32 %v2212, %v882
        %v2221 = vmul.f32 %v2213, %v886
        %v2222 = vsub.f32 %v898, %v2205
        %v2223 = vsub.f32 %v902, %v2205
        %v2224 = vsub.f32 %v906, %v2205
        %v2225 = vsub.f32 %v910, %v2205
        %v2226 = vsub.f32 %v914, %v2205
        %v2227 = vsub.f32 %v918, %v2205
        %v2228 = vsub.f32 %v922, %v2205
        %v2229 = vsub.f32 %v926, %v2205
        %v2230 = vmul.f32 %v2222, %v938
        %v2231 = vmul.f32 %v2223, %v942
        %v2232 = vmul.f32 %v2224, %v946
        %v2233 = vmul.f32 %v2225, %v950
        %v2234 = vmul.f32 %v2226, %v954
        %v2235 = vmul.f32 %v2227, %v958
        %v2236 = vmul.f32 %v2228, %v962
        %v2237 = vmul.f32 %v2229, %v966
        %v2238 = vmin.f32 %v2214, %v2230
        %v2239 = vmin.f32 %v2215, %v2231
        %v2240 = vmin.f32 %v2216, %v2232
        %v2241 = vmin.f32 %v2217, %v2233
        %v2242 = vmin.f32 %v2218, %v2234
        %v2243 = vmin.f32 %v2219, %v2235
        %v2244 = vmin.f32 %v2220, %v2236
        %v2245 = vmin.f32 %v2221, %v2237
        %v2246 = vmax.f32 %v2238, 0.0
        %v2247 = vmax.f32 %v2239, 0.0
        %v2248 = vmax.f32 %v2240, 0.0
        %v2249 = vmax.f32 %v2241, 0.0
        %v2250 = vmax.f32 %v2242, 0.0
        %v2251 = vmax.f32 %v2243, 0.0
        %v2252 = vmax.f32 %v2244, 0.0
        %v2253 = vmax.f32 %v2245, 0.0
        %v2254 = vmin.f32 %v2246, 1.0
        %v2255 = vmin.f32 %v2247, 1.0
        %v2256 = vmin.f32 %v2248, 1.0
        %v2257 = vmin.f32 %v2249, 1.0
        %v2258 = vmin.f32 %v2250, 1.0
        %v2259 = vmin.f32 %v2251, 1.0
        %v2260 = vmin.f32 %v2252, 1.0
        %v2261 = vmin.f32 %v2253, 1.0
        %v2262 = vmul.f32 %v2197, %v2254
        %v2263 = vmul.f32 %v2198, %v2255
        %v2264 = vmul.f32 %v2199, %v2256
        %v2265 = vmul.f32 %v2200, %v2257
        %v2266 = vmul.f32 %v2201, %v2258
        %v2267 = vmul.f32 %v2202, %v2259
        %v2268 = vmul.f32 %v2203, %v2260
        %v2269 = vmul.f32 %v2204, %v2261
        %v2270 = vperm.slane %v2041, 3
        %v2271 = vsub.f32 %v2270, %v1011
        %v2272 = vsub.f32 %v2270, %v1015
        %v2273 = vsub.f32 %v2270, %v1019
        %v2274 = vsub.f32 %v2270, %v1023
        %v2275 = vsub.f32 %v2270, %v1027
        %v2276 = vsub.f32 %v2270, %v1031
        %v2277 = vsub.f32 %v2270, %v1035
        %v2278 = vsub.f32 %v2270, %v1039
        %v2279 = vmul.f32 %v2271, %v1051
        %v2280 = vmul.f32 %v2272, %v1055
        %v2281 = vmul.f32 %v2273, %v1059
        %v2282 = vmul.f32 %v2274, %v1063
        %v2283 = vmul.f32 %v2275, %v1067
        %v2284 = vmul.f32 %v2276, %v1071
        %v2285 = vmul.f32 %v2277, %v1075
        %v2286 = vmul.f32 %v2278, %v1079
        %v2287 = vsub.f32 %v1091, %v2270
        %v2288 = vsub.f32 %v1095, %v2270
        %v2289 = vsub.f32 %v1099, %v2270
        %v2290 = vsub.f32 %v1103, %v2270
        %v2291 = vsub.f32 %v1107, %v2270
        %v2292 = vsub.f32 %v1111, %v2270
        %v2293 = vsub.f32 %v1115, %v2270
        %v2294 = vsub.f32 %v1119, %v2270
        %v2295 = vmul.f32 %v2287, %v1131
        %v2296 = vmul.f32 %v2288, %v1135
        %v2297 = vmul.f32 %v2289, %v1139
        %v2298 = vmul.f32 %v2290, %v1143
        %v2299 = vmul.f32 %v2291, %v1147
        %v2300 = vmul.f32 %v2292, %v1151
        %v2301 = vmul.f32 %v2293, %v1155
        %v2302 = vmul.f32 %v2294, %v1159
        %v2303 = vmin.f32 %v2279, %v2295
        %v2304 = vmin.f32 %v2280, %v2296
        %v2305 = vmin.f32 %v2281, %v2297
        %v2306 = vmin.f32 %v2282, %v2298
        %v2307 = vmin.f32 %v2283, %v2299
        %v2308 = vmin.f32 %v2284, %v2300
        %v2309 = vmin.f32 %v2285, %v2301
        %v2310 = vmin.f32 %v2286, %v2302
        %v2311 = vmax.f32 %v2303, 0.0
        %v2312 = vmax.f32 %v2304, 0.0
        %v2313 = vmax.f32 %v2305, 0.0
        %v2314 = vmax.f32 %v2306, 0.0
        %v2315 = vmax.f32 %v2307, 0.0
        %v2316 = vmax.f32 %v2308, 0.0
        %v2317 = vmax.f32 %v2309, 0.0
        %v2318 = vmax.f32 %v2310, 0.0
        %v2319 = vmin.f32 %v2311, 1.0
        %v2320 = vmin.f32 %v2312, 1.0
        %v2321 = vmin.f32 %v2313, 1.0
        %v2322 = vmin.f32 %v2314, 1.0
        %v2323 = vmin.f32 %v2315, 1.0
        %v2324 = vmin.f32 %v2316, 1.0
        %v2325 = vmin.f32 %v2317, 1.0
        %v2326 = vmin.f32 %v2318, 1.0
        %v2327 = vmul.f32 %v2262, %v2319
        %v2328 = vmul.f32 %v2263, %v2320
        %v2329 = vmul.f32 %v2264, %v2321
        %v2330 = vmul.f32 %v2265, %v2322
        %v2331 = vmul.f32 %v2266, %v2323
        %v2332 = vmul.f32 %v2267, %v2324
        %v2333 = vmul.f32 %v2268, %v2325
        %v2334 = vmul.f32 %v2269, %v2326
        %v2335 = vperm.slane %v2041, 4
        %v2336 = vsub.f32 %v2335, %v1204
        %v2337 = vsub.f32 %v2335, %v1208
        %v2338 = vsub.f32 %v2335, %v1212
        %v2339 = vsub.f32 %v2335, %v1216
        %v2340 = vsub.f32 %v2335, %v1220
        %v2341 = vsub.f32 %v2335, %v1224
        %v2342 = vsub.f32 %v2335, %v1228
        %v2343 = vsub.f32 %v2335, %v1232
        %v2344 = vmul.f32 %v2336, %v1244
        %v2345 = vmul.f32 %v2337, %v1248
        %v2346 = vmul.f32 %v2338, %v1252
        %v2347 = vmul.f32 %v2339, %v1256
        %v2348 = vmul.f32 %v2340, %v1260
        %v2349 = vmul.f32 %v2341, %v1264
        %v2350 = vmul.f32 %v2342, %v1268
        %v2351 = vmul.f32 %v2343, %v1272
        %v2352 = vsub.f32 %v1284, %v2335
        %v2353 = vsub.f32 %v1288, %v2335
        %v2354 = vsub.f32 %v1292, %v2335
        %v2355 = vsub.f32 %v1296, %v2335
        %v2356 = vsub.f32 %v1300, %v2335
        %v2357 = vsub.f32 %v1304, %v2335
        %v2358 = vsub.f32 %v1308, %v2335
        %v2359 = vsub.f32 %v1312, %v2335
        %v2360 = vmul.f32 %v2352, %v1324
        %v2361 = vmul.f32 %v2353, %v1328
        %v2362 = vmul.f32 %v2354, %v1332
        %v2363 = vmul.f32 %v2355, %v1336
        %v2364 = vmul.f32 %v2356, %v1340
        %v2365 = vmul.f32 %v2357, %v1344
        %v2366 = vmul.f32 %v2358, %v1348
        %v2367 = vmul.f32 %v2359, %v1352
        %v2368 = vmin.f32 %v2344, %v2360
        %v2369 = vmin.f32 %v2345, %v2361
        %v2370 = vmin.f32 %v2346, %v2362
        %v2371 = vmin.f32 %v2347, %v2363
        %v2372 = vmin.f32 %v2348, %v2364
        %v2373 = vmin.f32 %v2349, %v2365
        %v2374 = vmin.f32 %v2350, %v2366
        %v2375 = vmin.f32 %v2351, %v2367
        %v2376 = vmax.f32 %v2368, 0.0
        %v2377 = vmax.f32 %v2369, 0.0
        %v2378 = vmax.f32 %v2370, 0.0
        %v2379 = vmax.f32 %v2371, 0.0
        %v2380 = vmax.f32 %v2372, 0.0
        %v2381 = vmax.f32 %v2373, 0.0
        %v2382 = vmax.f32 %v2374, 0.0
        %v2383 = vmax.f32 %v2375, 0.0
        %v2384 = vmin.f32 %v2376, 1.0
        %v2385 = vmin.f32 %v2377, 1.0
        %v2386 = vmin.f32 %v2378, 1.0
        %v2387 = vmin.f32 %v2379, 1.0
        %v2388 = vmin.f32 %v2380, 1.0
        %v2389 = vmin.f32 %v2381, 1.0
        %v2390 = vmin.f32 %v2382, 1.0
        %v2391 = vmin.f32 %v2383, 1.0
        %v2392 = vmul.f32 %v2327, %v2384
        %v2393 = vmul.f32 %v2328, %v2385
        %v2394 = vmul.f32 %v2329, %v2386
        %v2395 = vmul.f32 %v2330, %v2387
        %v2396 = vmul.f32 %v2331, %v2388
        %v2397 = vmul.f32 %v2332, %v2389
        %v2398 = vmul.f32 %v2333, %v2390
        %v2399 = vmul.f32 %v2334, %v2391
        %v2400 = vperm.slane %v2041, 5
        %v2401 = vsub.f32 %v2400, %v1397
        %v2402 = vsub.f32 %v2400, %v1401
        %v2403 = vsub.f32 %v2400, %v1405
        %v2404 = vsub.f32 %v2400, %v1409
        %v2405 = vsub.f32 %v2400, %v1413
        %v2406 = vsub.f32 %v2400, %v1417
        %v2407 = vsub.f32 %v2400, %v1421
        %v2408 = vsub.f32 %v2400, %v1425
        %v2409 = vmul.f32 %v2401, %v1437
        %v2410 = vmul.f32 %v2402, %v1441
        %v2411 = vmul.f32 %v2403, %v1445
        %v2412 = vmul.f32 %v2404, %v1449
        %v2413 = vmul.f32 %v2405, %v1453
        %v2414 = vmul.f32 %v2406, %v1457
        %v2415 = vmul.f32 %v2407, %v1461
        %v2416 = vmul.f32 %v2408, %v1465
        %v2417 = vsub.f32 %v1477, %v2400
        %v2418 = vsub.f32 %v1481, %v2400
        %v2419 = vsub.f32 %v1485, %v2400
        %v2420 = vsub.f32 %v1489, %v2400
        %v2421 = vsub.f32 %v1493, %v2400
        %v2422 = vsub.f32 %v1497, %v2400
        %v2423 = vsub.f32 %v1501, %v2400
        %v2424 = vsub.f32 %v1505, %v2400
        %v2425 = vmul.f32 %v2417, %v1517
        %v2426 = vmul.f32 %v2418, %v1521
        %v2427 = vmul.f32 %v2419, %v1525
        %v2428 = vmul.f32 %v2420, %v1529
        %v2429 = vmul.f32 %v2421, %v1533
        %v2430 = vmul.f32 %v2422, %v1537
        %v2431 = vmul.f32 %v2423, %v1541
        %v2432 = vmul.f32 %v2424, %v1545
        %v2433 = vmin.f32 %v2409, %v2425
        %v2434 = vmin.f32 %v2410, %v2426
        %v2435 = vmin.f32 %v2411, %v2427
        %v2436 = vmin.f32 %v2412, %v2428
        %v2437 = vmin.f32 %v2413, %v2429
        %v2438 = vmin.f32 %v2414, %v2430
        %v2439 = vmin.f32 %v2415, %v2431
        %v2440 = vmin.f32 %v2416, %v2432
        %v2441 = vmax.f32 %v2433, 0.0
        %v2442 = vmax.f32 %v2434, 0.0
        %v2443 = vmax.f32 %v2435, 0.0
        %v2444 = vmax.f32 %v2436, 0.0
        %v2445 = vmax.f32 %v2437, 0.0
        %v2446 = vmax.f32 %v2438, 0.0
        %v2447 = vmax.f32 %v2439, 0.0
        %v2448 = vmax.f32 %v2440, 0.0
        %v2449 = vmin.f32 %v2441, 1.0
        %v2450 = vmin.f32 %v2442, 1.0
        %v2451 = vmin.f32 %v2443, 1.0
        %v2452 = vmin.f32 %v2444, 1.0
        %v2453 = vmin.f32 %v2445, 1.0
        %v2454 = vmin.f32 %v2446, 1.0
        %v2455 = vmin.f32 %v2447, 1.0
        %v2456 = vmin.f32 %v2448, 1.0
        %v2457 = vmul.f32 %v2392, %v2449
        %v2458 = vmul.f32 %v2393, %v2450
        %v2459 = vmul.f32 %v2394, %v2451
        %v2460 = vmul.f32 %v2395, %v2452
        %v2461 = vmul.f32 %v2396, %v2453
        %v2462 = vmul.f32 %v2397, %v2454
        %v2463 = vmul.f32 %v2398, %v2455
        %v2464 = vmul.f32 %v2399, %v2456
        %v2465 = vperm.slane %v2041, 6
        %v2466 = vsub.f32 %v2465, %v1590
        %v2467 = vsub.f32 %v2465, %v1594
        %v2468 = vsub.f32 %v2465, %v1598
        %v2469 = vsub.f32 %v2465, %v1602
        %v2470 = vsub.f32 %v2465, %v1606
        %v2471 = vsub.f32 %v2465, %v1610
        %v2472 = vsub.f32 %v2465, %v1614
        %v2473 = vsub.f32 %v2465, %v1618
        %v2474 = vmul.f32 %v2466, %v1630
        %v2475 = vmul.f32 %v2467, %v1634
        %v2476 = vmul.f32 %v2468, %v1638
        %v2477 = vmul.f32 %v2469, %v1642
        %v2478 = vmul.f32 %v2470, %v1646
        %v2479 = vmul.f32 %v2471, %v1650
        %v2480 = vmul.f32 %v2472, %v1654
        %v2481 = vmul.f32 %v2473, %v1658
        %v2482 = vsub.f32 %v1670, %v2465
        %v2483 = vsub.f32 %v1674, %v2465
        %v2484 = vsub.f32 %v1678, %v2465
        %v2485 = vsub.f32 %v1682, %v2465
        %v2486 = vsub.f32 %v1686, %v2465
        %v2487 = vsub.f32 %v1690, %v2465
        %v2488 = vsub.f32 %v1694, %v2465
        %v2489 = vsub.f32 %v1698, %v2465
        %v2490 = vmul.f32 %v2482, %v1710
        %v2491 = vmul.f32 %v2483, %v1714
        %v2492 = vmul.f32 %v2484, %v1718
        %v2493 = vmul.f32 %v2485, %v1722
        %v2494 = vmul.f32 %v2486, %v1726
        %v2495 = vmul.f32 %v2487, %v1730
        %v2496 = vmul.f32 %v2488, %v1734
        %v2497 = vmul.f32 %v2489, %v1738
        %v2498 = vmin.f32 %v2474, %v2490
        %v2499 = vmin.f32 %v2475, %v2491
        %v2500 = vmin.f32 %v2476, %v2492
        %v2501 = vmin.f32 %v2477, %v2493
        %v2502 = vmin.f32 %v2478, %v2494
        %v2503 = vmin.f32 %v2479, %v2495
        %v2504 = vmin.f32 %v2480, %v2496
        %v2505 = vmin.f32 %v2481, %v2497
        %v2506 = vmax.f32 %v2498, 0.0
        %v2507 = vmax.f32 %v2499, 0.0
        %v2508 = vmax.f32 %v2500, 0.0
        %v2509 = vmax.f32 %v2501, 0.0
        %v2510 = vmax.f32 %v2502, 0.0
        %v2511 = vmax.f32 %v2503, 0.0
        %v2512 = vmax.f32 %v2504, 0.0
        %v2513 = vmax.f32 %v2505, 0.0
        %v2514 = vmin.f32 %v2506, 1.0
        %v2515 = vmin.f32 %v2507, 1.0
        %v2516 = vmin.f32 %v2508, 1.0
        %v2517 = vmin.f32 %v2509, 1.0
        %v2518 = vmin.f32 %v2510, 1.0
        %v2519 = vmin.f32 %v2511, 1.0
        %v2520 = vmin.f32 %v2512, 1.0
        %v2521 = vmin.f32 %v2513, 1.0
        %v2522 = vmul.f32 %v2457, %v2514
        %v2523 = vmul.f32 %v2458, %v2515
        %v2524 = vmul.f32 %v2459, %v2516
        %v2525 = vmul.f32 %v2460, %v2517
        %v2526 = vmul.f32 %v2461, %v2518
        %v2527 = vmul.f32 %v2462, %v2519
        %v2528 = vmul.f32 %v2463, %v2520
        %v2529 = vmul.f32 %v2464, %v2521
        %v2530 = vperm.slane %v2041, 7
        %v2531 = vsub.f32 %v2530, %v1783
        %v2532 = vsub.f32 %v2530, %v1787
        %v2533 = vsub.f32 %v2530, %v1791
        %v2534 = vsub.f32 %v2530, %v1795
        %v2535 = vsub.f32 %v2530, %v1799
        %v2536 = vsub.f32 %v2530, %v1803
        %v2537 = vsub.f32 %v2530, %v1807
        %v2538 = vsub.f32 %v2530, %v1811
        %v2539 = vmul.f32 %v2531, %v1823
        %v2540 = vmul.f32 %v2532, %v1827
        %v2541 = vmul.f32 %v2533, %v1831
        %v2542 = vmul.f32 %v2534, %v1835
        %v2543 = vmul.f32 %v2535, %v1839
        %v2544 = vmul.f32 %v2536, %v1843
        %v2545 = vmul.f32 %v2537, %v1847
        %v2546 = vmul.f32 %v2538, %v1851
        %v2547 = vsub.f32 %v1863, %v2530
        %v2548 = vsub.f32 %v1867, %v2530
        %v2549 = vsub.f32 %v1871, %v2530
        %v2550 = vsub.f32 %v1875, %v2530
        %v2551 = vsub.f32 %v1879, %v2530
        %v2552 = vsub.f32 %v1883, %v2530
        %v2553 = vsub.f32 %v1887, %v2530
        %v2554 = vsub.f32 %v1891, %v2530
        %v2555 = vmul.f32 %v2547, %v1903
        %v2556 = vmul.f32 %v2548, %v1907
        %v2557 = vmul.f32 %v2549, %v1911
        %v2558 = vmul.f32 %v2550, %v1915
        %v2559 = vmul.f32 %v2551, %v1919
        %v2560 = vmul.f32 %v2552, %v1923
        %v2561 = vmul.f32 %v2553, %v1927
        %v2562 = vmul.f32 %v2554, %v1931
        %v2563 = vmin.f32 %v2539, %v2555
        %v2564 = vmin.f32 %v2540, %v2556
        %v2565 = vmin.f32 %v2541, %v2557
        %v2566 = vmin.f32 %v2542, %v2558
        %v2567 = vmin.f32 %v2543, %v2559
        %v2568 = vmin.f32 %v2544, %v2560
        %v2569 = vmin.f32 %v2545, %v2561
        %v2570 = vmin.f32 %v2546, %v2562
        %v2571 = vmax.f32 %v2563, 0.0
        %v2572 = vmax.f32 %v2564, 0.0
        %v2573 = vmax.f32 %v2565, 0.0
        %v2574 = vmax.f32 %v2566, 0.0
        %v2575 = vmax.f32 %v2567, 0.0
        %v2576 = vmax.f32 %v2568, 0.0
        %v2577 = vmax.f32 %v2569, 0.0
        %v2578 = vmax.f32 %v2570, 0.0
        %v2579 = vmin.f32 %v2571, 1.0
        %v2580 = vmin.f32 %v2572, 1.0
        %v2581 = vmin.f32 %v2573, 1.0
        %v2582 = vmin.f32 %v2574, 1.0
        %v2583 = vmin.f32 %v2575, 1.0
        %v2584 = vmin.f32 %v2576, 1.0
        %v2585 = vmin.f32 %v2577, 1.0
        %v2586 = vmin.f32 %v2578, 1.0
        %v2587 = vmul.f32 %v2522, %v2579
        %v2588 = vmul.f32 %v2523, %v2580
        %v2589 = vmul.f32 %v2524, %v2581
        %v2590 = vmul.f32 %v2525, %v2582
        %v2591 = vmul.f32 %v2526, %v2583
        %v2592 = vmul.f32 %v2527, %v2584
        %v2593 = vmul.f32 %v2528, %v2585
        %v2594 = vmul.f32 %v2529, %v2586
        %v2595 = vmul.f32 %v2060, %v2587
        %v2596 = vmul.f32 %v2063, %v2588
        %v2597 = vmul.f32 %v2066, %v2589
        %v2598 = vmul.f32 %v2069, %v2590
        %v2599 = vmul.f32 %v2072, %v2591
        %v2600 = vmul.f32 %v2075, %v2592
        %v2601 = vmul.f32 %v2078, %v2593
        %v2602 = vmul.f32 %v2081, %v2594
        %2603 = vmatpush.msra.mxu0 0.0
        %2604 = vmatpush.msra.mxu0 0.0
        %2605 = vmatpush.msra.mxu0 0.0
        %2606 = vmatpush.msra.mxu0 0.0
        %2607 = vmatpush.msra.mxu0 0.0
        %2608 = vmatpush.msra.mxu0 0.0
        %2609 = vmatpush.msra.mxu0 0.0
        %2610 = vmatpush.msra.mxu0 0.0
        %2611 = vmatpush.msra.mxu0 %v2602
        %2612 = vmatpush.msra.mxu0 %v2601
        %2613 = vmatpush.msra.mxu0 %v2600
        %2614 = vmatpush.msra.mxu0 %v2599
        %2615 = vmatpush.msra.mxu0 %v2598
        %2616 = vmatpush.msra.mxu0 %v2597
        %2617 = vmatpush.msra.mxu0 %v2596
        %2618 = vmatpush.msra.mxu0 %v2595
        %2619 = vmatmul.f32.gmra.mxu0 %v1983
        %v2620 = vpop.f32.mrf.mxu0
        %v2621 = vadd.f32 0.0, %v2620
        %2622 = vdwg.mxu0
        %2623 = vmatpush.msra.mxu0 0.0
        %2624 = vmatpush.msra.mxu0 0.0
        %2625 = vmatpush.msra.mxu0 0.0
        %2626 = vmatpush.msra.mxu0 0.0
        %2627 = vmatpush.msra.mxu0 0.0
        %2628 = vmatpush.msra.mxu0 0.0
        %2629 = vmatpush.msra.mxu0 0.0
        %2630 = vmatpush.msra.mxu0 0.0
        %2631 = vmatpush.msra.mxu0 %v2594
        %2632 = vmatpush.msra.mxu0 %v2593
        %2633 = vmatpush.msra.mxu0 %v2592
        %2634 = vmatpush.msra.mxu0 %v2591
        %2635 = vmatpush.msra.mxu0 %v2590
        %2636 = vmatpush.msra.mxu0 %v2589
        %2637 = vmatpush.msra.mxu0 %v2588
        %2638 = vmatpush.msra.mxu0 %v2587
        %2639 = vmatmul.f32.gmra.mxu0 %v1983
        %v2640 = vpop.f32.mrf.mxu0
        %v2641 = vadd.f32 1e-13, %v2640
        %2642 = vdwg.mxu0
        %v2643 = vrcp.pop %v2641
        %v2644 = vmul.f32 %v2641, %v2643
        %v2645 = vsub.f32 1.0, %v2644
        %v2646 = vmul.f32 %v2643, %v2645
        %v2647 = vadd.f32 %v2643, %v2646
        %vm2648 = vweird.f32 %v2641
        %vm2649 = vweird.f32 %v2643
        %vm2650 = vmor %vm2648, %vm2649
        %v2651 = vsel %vm2650, %v2643, %v2647
        %v2652 = vand.u32 2147483647, %v2641
        %vm2653 = vcmp.eq.f32.partialorder %v2652, 8.507059e+37
        %v2654 = vand.u32 %v2641, 2147483648
        %v2655 = vor.u32 1.1754944e-38, %v2654
        %v2656 = vsel %vm2653, %v2655, %v2651
        %v2657 = vmul.f32 %v2621, %v2656
        %2658 = vst [vmem:[%s230 + $0x8] sm:$0xff] %v2657
        %s2659 = sand.u32 %s137, 1
        %s2660 = scalar_lea.sflag [#allocation3], %s2659
        %s2661 = sand.u32 %s137, 1
        %s2662 = smul.addr %s2661, 16
        %s2663 = scalar_lea.vmem [#allocation2], %s2662
        // Predicated region
        $region41: #{tpu_custom_call.1} parent=39 // pred_check
          %p2664 = pneg %p147
        $region42: #{tpu_custom_call.1} parent=39 // pred_check_branch
          %2666 = sbr.rel (%p2664) target = $region44
        $region43: #{tpu_custom_call.1} parent=39 // pred_region
          %s2667 = smul.u32 2, %s19
          %2669 = vsyncadd %s2660, 0
          %s2670 = smul.addr %s2667, 8
          %s2671 = scalar_lea.hbm %s5, %s2670
          %s2673 = sshll.u32 %s2663, 4
          %s2674 = int_to_ptr.vmem [resolvable:$true] %s2673
          %s2675 = sshll.u32 %s2671, 4
          %s2676 = int_to_ptr.hbm [resolvable:$true] %s2675
          %2678 = dma.vmem_to_hbm [thread:$0]  %s2674, 256, %s2676, %s2660
        $region44: #{tpu_custom_call.1} parent=39 // pred_fallthru
          _
      $region40: #{tpu_custom_call.1} parent=5 // pred_fallthru
        _
      %p2679 = scmp.le.s32.totalorder 2, %s14
      // Predicated region
      $region45: #{tpu_custom_call.1} parent=5 // pred_check
        %p2680 = pneg %p2679
      $region46: #{tpu_custom_call.1} parent=5 // pred_check_branch
        %2682 = sbr.rel (%p2680) target = $region48
      $region47: #{tpu_custom_call.1} parent=5 // pred_region
        %s2683 = ssub.s32 %s14, 2
        // Predicated region
        $region49: #{tpu_custom_call.1} parent=47 // pred_check
          %p2684 = pneg %p153
        $region50: #{tpu_custom_call.1} parent=47 // pred_check_branch
          %2686 = sbr.rel (%p2684) target = $region52
        $region51: #{tpu_custom_call.1} parent=47 // pred_region
          %s2687 = sand.u32 %s138, 1
          %s2688 = scalar_lea.sflag [#allocation3], %s2687
          %s2689 = sand.u32 %s138, 1
          %s2690 = smul.addr %s2689, 16
          %s2691 = scalar_lea.vmem [#allocation2], %s2690
          %2693 = dma.done %s2688, 256
        $region52: #{tpu_custom_call.1} parent=47 // pred_fallthru
          _
      $region48: #{tpu_custom_call.1} parent=5 // pred_fallthru
        _
    $region6: #{tpu_custom_call.1} parent=1 // loop_footer
      %s18 = sadd.s32 1, %s14
    $region7: #{tpu_custom_call.1} parent=1 // loop_footer_branch
      %13 = sbr.rel target = $region3
    $region8: #{tpu_custom_call.1} parent=1 // loop_exit
      _
    %2694 = vsyncpa [#allocation3], 1
    %s2695 = scalar_lea.sflag [#allocation3], 1
    %2696 = vsyncpa %s2695, 1

</llo_original>
